<compile_context>
chip_gen: v7x
topology: tpu7x:2x2x1
jax: 0.10.0
libtpu: 0.0.40
codegen_flags: <defaults>
</compile_context>

<pallas_src>
import functools

import jax
import jax.numpy as jnp
from jax.experimental import pallas as pl
from jax.experimental.pallas import tpu as pltpu

LN_EPS = 1e-5

# Token-tile size for the M-tiled kernels (multiple of 8). With VMEM-resident
# weights the only other live tiles are (TM, D) in/out + the (TM, 4D) hidden,
# ~15 MiB at ViT-B scale -> fits v5e/v6e/v7x scoped VMEM with the limit below.
# Re-derive per generation if tiles are grown.
TM = 256
_VMEM_LIMIT = 32 * 1024 * 1024

_PAR1 = pltpu.CompilerParams(dimension_semantics=("parallel",),
                             vmem_limit_bytes=_VMEM_LIMIT)


def _tile_m(m):
    return m if m <= TM else TM


# ----------------------------- Pallas kernels -----------------------------

def _matmul_kernel(x_ref, w_ref, o_ref):
    # bias-free matmul (patch embedding); weight resident, grid over M only.
    o_ref[...] = jnp.dot(x_ref[...].astype(jnp.bfloat16), w_ref[...],
                         preferred_element_type=jnp.float32)


def _pos_ln_kernel(seq_ref, pos_ref, g_ref, b_ref, o_ref):
    # fused: + positional embedding, ln_pre. seq: (1, Lp, D); pos: (Lp, D).
    v = seq_ref[0] + pos_ref[...]
    mu = jnp.mean(v, axis=-1, keepdims=True)
    vc = v - mu
    var = jnp.mean(vc * vc, axis=-1, keepdims=True)
    o_ref[0] = vc * jax.lax.rsqrt(var + LN_EPS) * g_ref[...] + b_ref[...]


def _ln_kernel(x_ref, g_ref, b_ref, o_ref):
    # plain LayerNorm over the last dim (used for ln_post on the pooled CLS rows).
    x = x_ref[...]
    mu = jnp.mean(x, axis=-1, keepdims=True)
    xc = x - mu
    var = jnp.mean(xc * xc, axis=-1, keepdims=True)
    o_ref[...] = xc * jax.lax.rsqrt(var + LN_EPS) * g_ref[...] + b_ref[...]


def _attn_block_kernel(x_ref, g_ref, b_ref, wqkv_ref, bqkv_ref, wo_ref, bo_ref,
                       o_ref, *, heads, scale, valid_len):
    # Whole attention branch for one image, everything kept in VMEM:
    #   out = x + out_proj(MHA(ln_1(x)))
    # x: (1, Lp, D) f32 residual stream; weights bf16, resident.
    x = x_ref[0]                                   # (Lp, D) f32
    Lp, D = x.shape
    dh = D // heads

    # ln_1 (computed exactly once)
    mu = jnp.mean(x, axis=-1, keepdims=True)
    xc = x - mu
    var = jnp.mean(xc * xc, axis=-1, keepdims=True)
    h = xc * jax.lax.rsqrt(var + LN_EPS) * g_ref[...] + b_ref[...]

    # qkv projection (MXU, bf16 operands, f32 accumulation); stays in VMEM.
    qkv = jnp.dot(h.astype(jnp.bfloat16), wqkv_ref[...],
                  preferred_element_type=jnp.float32) + bqkv_ref[...]

    # additive key mask for padded sequence positions (static shapes).
    if valid_len < Lp:
        col = jax.lax.broadcasted_iota(jnp.int32, (Lp, Lp), 1)
        key_bias = jnp.where(col < valid_len, 0.0, -1e30).astype(jnp.float32)
    else:
        key_bias = None

    # Per-head attention; outputs are collected and stored with one lane-dense
    # full-width store (no sub-128-lane stores).
    # TODO(synk): at ViT-B scale (12 heads) move heads onto a grid axis or a
    # lax.fori_loop to bound code size / vreg live ranges.
    outs = []
    for hd in range(heads):
        lo = hd * dh
        q = qkv[:, lo:lo + dh].astype(jnp.bfloat16)
        k = qkv[:, D + lo:D + lo + dh].astype(jnp.bfloat16)
        v = qkv[:, 2 * D + lo:2 * D + lo + dh].astype(jnp.bfloat16)
        s = jnp.dot(q, k.T, preferred_element_type=jnp.float32) * scale
        if key_bias is not None:
            s = s + key_bias
        s = s - jnp.max(s, axis=-1, keepdims=True)
        p = jnp.exp(s)
        p = p * pl.reciprocal(jnp.sum(p, axis=-1, keepdims=True), approx=True)
        outs.append(jnp.dot(p.astype(jnp.bfloat16), v,
                            preferred_element_type=jnp.float32))
    attn = jnp.concatenate(outs, axis=-1)          # (Lp, D), lane-dense

    # out projection + residual add, single aligned store.
    y = jnp.dot(attn.astype(jnp.bfloat16), wo_ref[...],
                preferred_element_type=jnp.float32) + bo_ref[...]
    o_ref[0] = x + y


def _mlp_block_kernel(x_ref, g_ref, b_ref, wfc_ref, bfc_ref, wpr_ref, bpr_ref,
                      o_ref):
    # Whole MLP branch for one token tile:
    #   out = x + c_proj(QuickGELU(c_fc(ln_2(x))))
    # The (tm, 4D) hidden never leaves VMEM.
    x = x_ref[...]
    mu = jnp.mean(x, axis=-1, keepdims=True)
    xc = x - mu
    var = jnp.mean(xc * xc, axis=-1, keepdims=True)
    h = xc * jax.lax.rsqrt(var + LN_EPS) * g_ref[...] + b_ref[...]

    f = jnp.dot(h.astype(jnp.bfloat16), wfc_ref[...],
                preferred_element_type=jnp.float32) + bfc_ref[...]
    f = f * jax.nn.sigmoid(1.702 * f)              # QuickGELU (OpenAI CLIP)

    y = jnp.dot(f.astype(jnp.bfloat16), wpr_ref[...],
                preferred_element_type=jnp.float32) + bpr_ref[...]
    o_ref[...] = x + y


# ----------------------------- pallas_call wrappers -----------------------------

def pallas_matmul(x, w):
    # bias-free x @ w; x: (M, K) f32, w: (K, N) bf16 resident, grid over M tiles.
    M, K = x.shape
    N = w.shape[1]
    tm = _tile_m(M)
    return pl.pallas_call(
        _matmul_kernel,
        out_shape=jax.ShapeDtypeStruct((M, N), jnp.float32),
        grid=(pl.cdiv(M, tm),),
        in_specs=[
            pl.BlockSpec((tm, K), lambda i: (i, 0)),
            pl.BlockSpec((K, N), lambda i: (0, 0)),      # resident weight
        ],
        out_specs=pl.BlockSpec((tm, N), lambda i: (i, 0)),
        compiler_params=_PAR1,
    )(x, w)


def pallas_pos_ln(seq, pos, g, b):
    # fused positional-embedding add + ln_pre, grid over images.
    B, Lp, D = seq.shape
    return pl.pallas_call(
        _pos_ln_kernel,
        out_shape=jax.ShapeDtypeStruct((B, Lp, D), jnp.float32),
        grid=(B,),
        in_specs=[
            pl.BlockSpec((1, Lp, D), lambda i: (i, 0, 0)),
            pl.BlockSpec((Lp, D), lambda i: (0, 0)),
            pl.BlockSpec((1, D), lambda i: (0, 0)),
            pl.BlockSpec((1, D), lambda i: (0, 0)),
        ],
        out_specs=pl.BlockSpec((1, Lp, D), lambda i: (i, 0, 0)),
        compiler_params=_PAR1,
    )(seq, pos, g, b)


def pallas_attn_block(x, blk, *, heads, scale, valid_len):
    # fused attention branch per image: x + out_proj(MHA(ln_1(x))).
    B, Lp, D = x.shape
    kern = functools.partial(_attn_block_kernel, heads=heads, scale=scale,
                             valid_len=valid_len)
    return pl.pallas_call(
        kern,
        out_shape=jax.ShapeDtypeStruct((B, Lp, D), jnp.float32),
        grid=(B,),
        in_specs=[
            pl.BlockSpec((1, Lp, D), lambda i: (i, 0, 0)),
            pl.BlockSpec((1, D), lambda i: (0, 0)),          # ln1 gamma
            pl.BlockSpec((1, D), lambda i: (0, 0)),          # ln1 beta
            pl.BlockSpec((D, 3 * D), lambda i: (0, 0)),      # in_proj_w resident
            pl.BlockSpec((1, 3 * D), lambda i: (0, 0)),      # in_proj_b
            pl.BlockSpec((D, D), lambda i: (0, 0)),          # out_w resident
            pl.BlockSpec((1, D), lambda i: (0, 0)),          # out_b
        ],
        out_specs=pl.BlockSpec((1, Lp, D), lambda i: (i, 0, 0)),
        compiler_params=_PAR1,
    )(x, blk["ln1_g"], blk["ln1_b"], blk["in_proj_w"], blk["in_proj_b"],
      blk["out_w"], blk["out_b"])


def pallas_mlp_block(x, blk):
    # fused MLP branch over token tiles: x + c_proj(QuickGELU(c_fc(ln_2(x)))).
    M, D = x.shape
    Dm = blk["fc_w"].shape[1]
    tm = _tile_m(M)
    return pl.pallas_call(
        _mlp_block_kernel,
        out_shape=jax.ShapeDtypeStruct((M, D), jnp.float32),
        grid=(pl.cdiv(M, tm),),
        in_specs=[
            pl.BlockSpec((tm, D), lambda i: (i, 0)),
            pl.BlockSpec((1, D), lambda i: (0, 0)),          # ln2 gamma
            pl.BlockSpec((1, D), lambda i: (0, 0)),          # ln2 beta
            pl.BlockSpec((D, Dm), lambda i: (0, 0)),         # fc_w resident
            pl.BlockSpec((1, Dm), lambda i: (0, 0)),         # fc_b
            pl.BlockSpec((Dm, D), lambda i: (0, 0)),         # proj_w resident
            pl.BlockSpec((1, D), lambda i: (0, 0)),          # proj_b
        ],
        out_specs=pl.BlockSpec((tm, D), lambda i: (i, 0)),
        compiler_params=_PAR1,
    )(x, blk["ln2_g"], blk["ln2_b"], blk["fc_w"], blk["fc_b"],
      blk["proj_w"], blk["proj_b"])


def pallas_ln(x, g, b):
    # ln_post on the already-pooled CLS rows; tiny, whole arrays in VMEM.
    M, D = x.shape
    return pl.pallas_call(
        _ln_kernel,
        out_shape=jax.ShapeDtypeStruct((M, D), jnp.float32),
    )(x, g, b)


# ----------------------------- model -----------------------------

def init_params(key, *, width=32, heads=4, layers=2, patch=8, in_ch=3, img=16,
                mlp_ratio=4):
    """Synthetic weights. All matmul weights are pre-transposed once to (K, N)
    layout and pre-cast to bf16 (MXU operand dtype); LN/bias params stay f32.
    Positional embedding is pre-padded to the sublane-aligned sequence length."""
    assert width % heads == 0
    seq = (img // patch) ** 2 + 1
    seq_pad = ((seq + 7) // 8) * 8

    def nrm(k, shape, s=0.02):
        return jax.random.normal(k, shape, jnp.float32) * s

    ones = jnp.ones((1, width), jnp.float32)
    zeros = jnp.zeros((1, width), jnp.float32)

    keys = jax.random.split(key, 4 + layers)
    params = dict(width=width, heads=heads, patch=patch, seq=seq)
    # conv1 weight (out, in, kh, kw), bias=False -> (C*P*P, width) bf16
    conv_w = nrm(keys[0], (width, in_ch, patch, patch))
    params["conv_w"] = conv_w.reshape(width, in_ch * patch * patch).T.astype(jnp.bfloat16)
    params["class_emb"] = nrm(keys[1], (width,))
    pos = nrm(keys[2], (seq, width))
    if seq_pad > seq:
        pos = jnp.concatenate([pos, jnp.zeros((seq_pad - seq, width), jnp.float32)], 0)
    params["pos_emb"] = pos                                   # (Lp, D)
    params["ln_pre"] = (ones, zeros)
    params["ln_post"] = (ones, zeros)

    blocks = []
    for l in range(layers):
        bk = jax.random.split(keys[4 + l], 8)
        blocks.append(dict(
            ln1_g=ones, ln1_b=zeros,
            # PyTorch stores (out, in); pre-transpose to (in, out), cast to bf16
            in_proj_w=nrm(bk[0], (3 * width, width)).T.astype(jnp.bfloat16),
            in_proj_b=nrm(bk[1], (3 * width,)).reshape(1, 3 * width),
            out_w=nrm(bk[2], (width, width)).T.astype(jnp.bfloat16),
            out_b=nrm(bk[3], (width,)).reshape(1, width),
            ln2_g=ones, ln2_b=zeros,
            fc_w=nrm(bk[4], (mlp_ratio * width, width)).T.astype(jnp.bfloat16),
            fc_b=nrm(bk[5], (mlp_ratio * width,)).reshape(1, mlp_ratio * width),
            proj_w=nrm(bk[6], (width, mlp_ratio * width)).T.astype(jnp.bfloat16),
            proj_b=nrm(bk[7], (width,)).reshape(1, width),
        ))
    params["blocks"] = blocks
    return params


def encode_image(params, x):
    """open_clip VisionTransformer.forward with proj=None. x: (B, C, H, W) NCHW."""
    B, C, H, W = x.shape
    P = params["patch"]
    D = params["width"]
    Hn = params["heads"]
    gh, gw = H // P, W // P
    N = gh * gw
    L = N + 1
    Lp = params["pos_emb"].shape[0]                 # padded (multiple of 8)
    Dh = D // Hn
    scale = 1.0 / (Dh ** 0.5)

    # conv1 as unfold + bias-free matmul (stride == kernel == patch size).
    # The unfold / concat / pad below are pure data layout, left to XLA.
    patches = (
        x.reshape(B, C, gh, P, gw, P)
         .transpose(0, 2, 4, 1, 3, 5)
         .reshape(B * N, C * P * P)
    )
    tok = pallas_matmul(patches, params["conv_w"]).reshape(B, N, D)

    cls = jnp.broadcast_to(params["class_emb"].reshape(1, 1, D), (B, 1, D))
    seq = jnp.concatenate([cls, tok], axis=1)       # (B, L, D)
    if Lp > L:
        seq = jnp.concatenate(
            [seq, jnp.zeros((B, Lp - L, D), jnp.float32)], axis=1)

    # fused: positional embedding + ln_pre (aligned full-block store)
    xs = pallas_pos_ln(seq, params["pos_emb"], *params["ln_pre"])  # (B, Lp, D)

    for blk in params["blocks"]:
        # attention branch: one fused kernel per image (padded keys masked)
        xs = pallas_attn_block(xs, blk, heads=Hn, scale=scale, valid_len=L)
        # MLP branch: one fused kernel over token tiles
        xs = pallas_mlp_block(xs.reshape(B * Lp, D), blk).reshape(B, Lp, D)

    # 'tok' pooling: slice the CLS row in the wrapper, ln_post on (B, D) only.
    cls_tok = xs[:, 0, :]
    return pallas_ln(cls_tok, *params["ln_post"])


class ImageClipPallas:
    """Pallas equivalent of ImageClip.forward."""

    def __init__(self, params):
        self.params = params
        self._encode = jax.jit(functools.partial(encode_image, params))

    def __call__(self, image1, image2=None):
        if image2 is not None:
            images = jnp.concatenate([image1, image2], axis=0)
            emb = self._encode(images)
            n1 = image1.shape[0]
            return emb[:n1], emb[n1:]
        return self._encode(image1)


if __name__ == "__main__":
    key = jax.random.PRNGKey(0)
    k_img1, k_img2, k_params = jax.random.split(key, 3)

    params = init_params(k_params, width=32, heads=4, layers=2, patch=8,
                         in_ch=3, img=16)
    model = ImageClipPallas(params)

    image1 = jax.random.normal(k_img1, (2, 3, 16, 16), jnp.float32)   # NCHW
    image2 = jax.random.normal(k_img2, (2, 3, 16, 16), jnp.float32)

    emb1, emb2 = model(image1, image2)
    jax.block_until_ready((emb1, emb2))
    assert emb1.shape == (2, 32) and emb2.shape == (2, 32)
    assert bool(jnp.all(jnp.isfinite(emb1))) and bool(jnp.all(jnp.isfinite(emb2)))

    # single-image path
    emb_single = model(image1)
    jax.block_until_ready(emb_single)
    assert emb_single.shape == (2, 32)
    assert bool(jnp.all(jnp.isfinite(emb_single)))

    print("KERNEL_OK")
</pallas_src>

<mosaic_0001>
module attributes {stable_mosaic.version = 11 : i64} {
  func.func @_matmul_kernel(%arg0: i32, %arg1: memref<16x192xf32, #tpu.memory_space<vmem>>, %arg2: memref<192x32xbf16, #tpu.memory_space<vmem>>, %arg3: memref<16x32xf32, #tpu.memory_space<vmem>>) attributes {dimension_semantics = [#tpu.dimension_semantics<parallel>], iteration_bounds = array<i64: 1>, scalar_prefetch = 0 : i64, scratch_operands = 0 : i64, tpu.core_type = #tpu.core_type<tc>, window_params = [{transform_indices = @transform_0, window_bounds = array<i64: 16, 192>}, {pipeline_mode = #tpu.pipeline_mode<synchronous>, transform_indices = @transform_1, window_bounds = array<i64: 192, 32>}, {transform_indices = @transform_2, window_bounds = array<i64: 16, 32>}]} {
    %c0 = arith.constant 0 : index
    %c0_0 = arith.constant 0 : index
    %0 = vector.load %arg1[%c0, %c0_0] : memref<16x192xf32, #tpu.memory_space<vmem>>, vector<16x192xf32>
    %1 = arith.truncf %0 : vector<16x192xf32> to vector<16x192xbf16>
    %c0_1 = arith.constant 0 : index
    %c0_2 = arith.constant 0 : index
    %2 = vector.load %arg2[%c0_1, %c0_2] : memref<192x32xbf16, #tpu.memory_space<vmem>>, vector<192x32xbf16>
    %cst = arith.constant dense<0.000000e+00> : vector<16x32xf32>
    %3 = tpu.matmul %1, %2, %cst {dimension_numbers = #tpu.dot_dimension_numbers<[1], [0], [0], [1], [0, 0, 1, 1], [], []>} : vector<16x192xbf16>, vector<192x32xbf16>, vector<16x32xf32> -> vector<16x32xf32>
    %c0_3 = arith.constant 0 : index
    %c0_4 = arith.constant 0 : index
    %4 = vector.load %arg3[%c0_3, %c0_4] : memref<16x32xf32, #tpu.memory_space<vmem>>, vector<16x32xf32>
    tpu.vector_store %arg3[%c0_3, %c0_4], %3 {strides = array<i32>} : memref<16x32xf32, #tpu.memory_space<vmem>>, vector<16x32xf32>,
    return
  }
  func.func @transform_0(%arg0: i32) -> (i32, i32) {
    %c0_i32 = arith.constant 0 : i32
    %c0_i32_0 = arith.constant 0 : i32
    return %arg0, %c0_i32 : i32, i32
  }
  func.func @transform_1(%arg0: i32) -> (i32, i32) {
    %c0_i32 = arith.constant 0 : i32
    %c0_i32_0 = arith.constant 0 : i32
    %c0_i32_1 = arith.constant 0 : i32
    return %c0_i32, %c0_i32_0 : i32, i32
  }
  func.func @transform_2(%arg0: i32) -> (i32, i32) {
    %c0_i32 = arith.constant 0 : i32
    %c0_i32_0 = arith.constant 0 : i32
    return %arg0, %c0_i32 : i32, i32
  }
}

module attributes {stable_mosaic.version = 11 : i64} {
  func.func @_attn_block_kernel(%arg0: i32, %arg1: memref<1x8x32xf32, #tpu.memory_space<vmem>>, %arg2: memref<1x32xf32, #tpu.memory_space<vmem>>, %arg3: memref<1x32xf32, #tpu.memory_space<vmem>>, %arg4: memref<32x96xbf16, #tpu.memory_space<vmem>>, %arg5: memref<1x96xf32, #tpu.memory_space<vmem>>, %arg6: memref<32x32xbf16, #tpu.memory_space<vmem>>, %arg7: memref<1x32xf32, #tpu.memory_space<vmem>>, %arg8: memref<1x8x32xf32, #tpu.memory_space<vmem>>) attributes {dimension_semantics = [#tpu.dimension_semantics<parallel>], iteration_bounds = array<i64: 4>, scalar_prefetch = 0 : i64, scratch_operands = 0 : i64, tpu.core_type = #tpu.core_type<tc>, window_params = [{transform_indices = @transform_0, window_bounds = array<i64: 1, 8, 32>}, {pipeline_mode = #tpu.pipeline_mode<synchronous>, transform_indices = @transform_1, window_bounds = array<i64: 1, 32>}, {pipeline_mode = #tpu.pipeline_mode<synchronous>, transform_indices = @transform_2, window_bounds = array<i64: 1, 32>}, {pipeline_mode = #tpu.pipeline_mode<synchronous>, transform_indices = @transform_3, window_bounds = array<i64: 32, 96>}, {pipeline_mode = #tpu.pipeline_mode<synchronous>, transform_indices = @transform_4, window_bounds = array<i64: 1, 96>}, {pipeline_mode = #tpu.pipeline_mode<synchronous>, transform_indices = @transform_5, window_bounds = array<i64: 32, 32>}, {pipeline_mode = #tpu.pipeline_mode<synchronous>, transform_indices = @transform_6, window_bounds = array<i64: 1, 32>}, {transform_indices = @transform_7, window_bounds = array<i64: 1, 8, 32>}]} {
    %c0 = arith.constant 0 : index
    %c0_0 = arith.constant 0 : index
    %c0_1 = arith.constant 0 : index
    %0 = vector.load %arg1[%c0, %c0_0, %c0_1] : memref<1x8x32xf32, #tpu.memory_space<vmem>>, vector<1x8x32xf32>
    %1 = vector.shape_cast %0 : vector<1x8x32xf32> to vector<8x32xf32>
    %cst = arith.constant dense<0.000000e+00> : vector<8xf32>
    %2 = vector.multi_reduction <add>, %1, %cst [1] : vector<8x32xf32> to vector<8xf32>
    %3 = vector.shape_cast %2 : vector<8xf32> to vector<8x1xf32>
    %cst_2 = arith.constant 3.200000e+01 : f32
    %4 = vector.broadcast %cst_2 : f32 to vector<8x1xf32>
    %5 = arith.divf %3, %4 : vector<8x1xf32>
    %6 = vector.broadcast %5 : vector<8x1xf32> to vector<8x32xf32>
    %7 = arith.subf %1, %6 : vector<8x32xf32>
    %8 = arith.mulf %7, %7 : vector<8x32xf32>
    %cst_3 = arith.constant dense<0.000000e+00> : vector<8xf32>
    %9 = vector.multi_reduction <add>, %8, %cst_3 [1] : vector<8x32xf32> to vector<8xf32>
    %10 = vector.shape_cast %9 : vector<8xf32> to vector<8x1xf32>
    %cst_4 = arith.constant 3.200000e+01 : f32
    %11 = vector.broadcast %cst_4 : f32 to vector<8x1xf32>
    %12 = arith.divf %10, %11 : vector<8x1xf32>
    %cst_5 = arith.constant 9.99999974E-6 : f32
    %13 = vector.broadcast %cst_5 : f32 to vector<8x1xf32>
    %14 = arith.addf %12, %13 : vector<8x1xf32>
    %15 = math.rsqrt %14 : vector<8x1xf32>
    %16 = vector.broadcast %15 : vector<8x1xf32> to vector<8x32xf32>
    %17 = arith.mulf %7, %16 : vector<8x32xf32>
    %c0_6 = arith.constant 0 : index
    %c0_7 = arith.constant 0 : index
    %18 = vector.load %arg2[%c0_6, %c0_7] : memref<1x32xf32, #tpu.memory_space<vmem>>, vector<1x32xf32>
    %19 = vector.broadcast %18 : vector<1x32xf32> to vector<8x32xf32>
    %20 = arith.mulf %17, %19 : vector<8x32xf32>
    %c0_8 = arith.constant 0 : index
    %c0_9 = arith.constant 0 : index
    %21 = vector.load %arg3[%c0_8, %c0_9] : memref<1x32xf32, #tpu.memory_space<vmem>>, vector<1x32xf32>
    %22 = vector.broadcast %21 : vector<1x32xf32> to vector<8x32xf32>
    %23 = arith.addf %20, %22 : vector<8x32xf32>
    %24 = arith.truncf %23 : vector<8x32xf32> to vector<8x32xbf16>
    %c0_10 = arith.constant 0 : index
    %c0_11 = arith.constant 0 : index
    %25 = vector.load %arg4[%c0_10, %c0_11] : memref<32x96xbf16, #tpu.memory_space<vmem>>, vector<32x96xbf16>
    %cst_12 = arith.constant dense<0.000000e+00> : vector<8x96xf32>
    %26 = tpu.matmul %24, %25, %cst_12 {dimension_numbers = #tpu.dot_dimension_numbers<[1], [0], [0], [1], [0, 0, 1, 1], [], []>} : vector<8x32xbf16>, vector<32x96xbf16>, vector<8x96xf32> -> vector<8x96xf32>
    %c0_13 = arith.constant 0 : index
    %c0_14 = arith.constant 0 : index
    %27 = vector.load %arg5[%c0_13, %c0_14] : memref<1x96xf32, #tpu.memory_space<vmem>>, vector<1x96xf32>
    %28 = vector.broadcast %27 : vector<1x96xf32> to vector<8x96xf32>
    %29 = arith.addf %26, %28 : vector<8x96xf32>
    %30 = tpu.iota {dimensions = array<i32: 1>} : vector<8x8xi32>
    %c5_i32 = arith.constant 5 : i32
    %31 = vector.broadcast %c5_i32 : i32 to vector<8x8xi32>
    %32 = arith.cmpi slt, %30, %31 : vector<8x8xi32>
    %cst_15 = arith.constant 0.000000e+00 : f32
    %cst_16 = arith.constant -1.000000e+30 : f32
    %33 = vector.broadcast %cst_15 : f32 to vector<8x8xf32>
    %34 = vector.broadcast %cst_16 : f32 to vector<8x8xf32>
    %35 = arith.select %32, %33, %34 : vector<8x8xi1>, vector<8x8xf32>
    %36 = vector.extract_strided_slice %29 {offsets = [0, 0], sizes = [8, 8], strides = [1, 1]} : vector<8x96xf32> to vector<8x8xf32>
    %37 = arith.truncf %36 : vector<8x8xf32> to vector<8x8xbf16>
    %38 = vector.extract_strided_slice %29 {offsets = [0, 32], sizes = [8, 8], strides = [1, 1]} : vector<8x96xf32> to vector<8x8xf32>
    %39 = arith.truncf %38 : vector<8x8xf32> to vector<8x8xbf16>
    %40 = vector.extract_strided_slice %29 {offsets = [0, 64], sizes = [8, 8], strides = [1, 1]} : vector<8x96xf32> to vector<8x8xf32>
    %41 = arith.truncf %40 : vector<8x8xf32> to vector<8x8xbf16>
    %42 = tpu.transpose %39, [1, 0] : vector<8x8xbf16> -> vector<8x8xbf16>
    %cst_17 = arith.constant dense<0.000000e+00> : vector<8x8xf32>
    %43 = tpu.matmul %37, %42, %cst_17 {dimension_numbers = #tpu.dot_dimension_numbers<[1], [0], [0], [1], [0, 0, 1, 1], [], []>} : vector<8x8xbf16>, vector<8x8xbf16>, vector<8x8xf32> -> vector<8x8xf32>
    %cst_18 = arith.constant 0.353553385 : f32
    %44 = vector.broadcast %cst_18 : f32 to vector<8x8xf32>
    %45 = arith.mulf %43, %44 : vector<8x8xf32>
    %46 = arith.addf %45, %35 : vector<8x8xf32>
    %cst_19 = arith.constant dense<0xFF800000> : vector<8xf32>
    %47 = vector.multi_reduction <maximumf>, %46, %cst_19 [1] : vector<8x8xf32> to vector<8xf32>
    %48 = vector.shape_cast %47 : vector<8xf32> to vector<8x1xf32>
    %49 = vector.broadcast %48 : vector<8x1xf32> to vector<8x8xf32>
    %50 = arith.subf %46, %49 : vector<8x8xf32>
    %51 = math.exp %50 : vector<8x8xf32>
    %cst_20 = arith.constant dense<0.000000e+00> : vector<8xf32>
    %52 = vector.multi_reduction <add>, %51, %cst_20 [1] : vector<8x8xf32> to vector<8xf32>
    %53 = vector.shape_cast %52 : vector<8xf32> to vector<8x1xf32>
    %54 = tpu.reciprocal %53 {approx = true} : vector<8x1xf32> -> vector<8x1xf32>
    %55 = vector.broadcast %54 : vector<8x1xf32> to vector<8x8xf32>
    %56 = arith.mulf %51, %55 : vector<8x8xf32>
    %57 = arith.truncf %56 : vector<8x8xf32> to vector<8x8xbf16>
    %cst_21 = arith.constant dense<0.000000e+00> : vector<8x8xf32>
    %58 = tpu.matmul %57, %41, %cst_21 {dimension_numbers = #tpu.dot_dimension_numbers<[1], [0], [0], [1], [0, 0, 1, 1], [], []>} : vector<8x8xbf16>, vector<8x8xbf16>, vector<8x8xf32> -> vector<8x8xf32>
    %59 = vector.extract_strided_slice %29 {offsets = [0, 8], sizes = [8, 8], strides = [1, 1]} : vector<8x96xf32> to vector<8x8xf32>
    %60 = arith.truncf %59 : vector<8x8xf32> to vector<8x8xbf16>
    %61 = vector.extract_strided_slice %29 {offsets = [0, 40], sizes = [8, 8], strides = [1, 1]} : vector<8x96xf32> to vector<8x8xf32>
    %62 = arith.truncf %61 : vector<8x8xf32> to vector<8x8xbf16>
    %63 = vector.extract_strided_slice %29 {offsets = [0, 72], sizes = [8, 8], strides = [1, 1]} : vector<8x96xf32> to vector<8x8xf32>
    %64 = arith.truncf %63 : vector<8x8xf32> to vector<8x8xbf16>
    %65 = tpu.transpose %62, [1, 0] : vector<8x8xbf16> -> vector<8x8xbf16>
    %cst_22 = arith.constant dense<0.000000e+00> : vector<8x8xf32>
    %66 = tpu.matmul %60, %65, %cst_22 {dimension_numbers = #tpu.dot_dimension_numbers<[1], [0], [0], [1], [0, 0, 1, 1], [], []>} : vector<8x8xbf16>, vector<8x8xbf16>, vector<8x8xf32> -> vector<8x8xf32>
    %cst_23 = arith.constant 0.353553385 : f32
    %67 = vector.broadcast %cst_23 : f32 to vector<8x8xf32>
    %68 = arith.mulf %66, %67 : vector<8x8xf32>
    %69 = arith.addf %68, %35 : vector<8x8xf32>
    %cst_24 = arith.constant dense<0xFF800000> : vector<8xf32>
    %70 = vector.multi_reduction <maximumf>, %69, %cst_24 [1] : vector<8x8xf32> to vector<8xf32>
    %71 = vector.shape_cast %70 : vector<8xf32> to vector<8x1xf32>
    %72 = vector.broadcast %71 : vector<8x1xf32> to vector<8x8xf32>
    %73 = arith.subf %69, %72 : vector<8x8xf32>
    %74 = math.exp %73 : vector<8x8xf32>
    %cst_25 = arith.constant dense<0.000000e+00> : vector<8xf32>
    %75 = vector.multi_reduction <add>, %74, %cst_25 [1] : vector<8x8xf32> to vector<8xf32>
    %76 = vector.shape_cast %75 : vector<8xf32> to vector<8x1xf32>
    %77 = tpu.reciprocal %76 {approx = true} : vector<8x1xf32> -> vector<8x1xf32>
    %78 = vector.broadcast %77 : vector<8x1xf32> to vector<8x8xf32>
    %79 = arith.mulf %74, %78 : vector<8x8xf32>
    %80 = arith.truncf %79 : vector<8x8xf32> to vector<8x8xbf16>
    %cst_26 = arith.constant dense<0.000000e+00> : vector<8x8xf32>
    %81 = tpu.matmul %80, %64, %cst_26 {dimension_numbers = #tpu.dot_dimension_numbers<[1], [0], [0], [1], [0, 0, 1, 1], [], []>} : vector<8x8xbf16>, vector<8x8xbf16>, vector<8x8xf32> -> vector<8x8xf32>
    %82 = vector.extract_strided_slice %29 {offsets = [0, 16], sizes = [8, 8], strides = [1, 1]} : vector<8x96xf32> to vector<8x8xf32>
    %83 = arith.truncf %82 : vector<8x8xf32> to vector<8x8xbf16>
    %84 = vector.extract_strided_slice %29 {offsets = [0, 48], sizes = [8, 8], strides = [1, 1]} : vector<8x96xf32> to vector<8x8xf32>
    %85 = arith.truncf %84 : vector<8x8xf32> to vector<8x8xbf16>
    %86 = vector.extract_strided_slice %29 {offsets = [0, 80], sizes = [8, 8], strides = [1, 1]} : vector<8x96xf32> to vector<8x8xf32>
    %87 = arith.truncf %86 : vector<8x8xf32> to vector<8x8xbf16>
    %88 = tpu.transpose %85, [1, 0] : vector<8x8xbf16> -> vector<8x8xbf16>
    %cst_27 = arith.constant dense<0.000000e+00> : vector<8x8xf32>
    %89 = tpu.matmul %83, %88, %cst_27 {dimension_numbers = #tpu.dot_dimension_numbers<[1], [0], [0], [1], [0, 0, 1, 1], [], []>} : vector<8x8xbf16>, vector<8x8xbf16>, vector<8x8xf32> -> vector<8x8xf32>
    %cst_28 = arith.constant 0.353553385 : f32
    %90 = vector.broadcast %cst_28 : f32 to vector<8x8xf32>
    %91 = arith.mulf %89, %90 : vector<8x8xf32>
    %92 = arith.addf %91, %35 : vector<8x8xf32>
    %cst_29 = arith.constant dense<0xFF800000> : vector<8xf32>
    %93 = vector.multi_reduction <maximumf>, %92, %cst_29 [1] : vector<8x8xf32> to vector<8xf32>
    %94 = vector.shape_cast %93 : vector<8xf32> to vector<8x1xf32>
    %95 = vector.broadcast %94 : vector<8x1xf32> to vector<8x8xf32>
    %96 = arith.subf %92, %95 : vector<8x8xf32>
    %97 = math.exp %96 : vector<8x8xf32>
    %cst_30 = arith.constant dense<0.000000e+00> : vector<8xf32>
    %98 = vector.multi_reduction <add>, %97, %cst_30 [1] : vector<8x8xf32> to vector<8xf32>
    %99 = vector.shape_cast %98 : vector<8xf32> to vector<8x1xf32>
    %100 = tpu.reciprocal %99 {approx = true} : vector<8x1xf32> -> vector<8x1xf32>
    %101 = vector.broadcast %100 : vector<8x1xf32> to vector<8x8xf32>
    %102 = arith.mulf %97, %101 : vector<8x8xf32>
    %103 = arith.truncf %102 : vector<8x8xf32> to vector<8x8xbf16>
    %cst_31 = arith.constant dense<0.000000e+00> : vector<8x8xf32>
    %104 = tpu.matmul %103, %87, %cst_31 {dimension_numbers = #tpu.dot_dimension_numbers<[1], [0], [0], [1], [0, 0, 1, 1], [], []>} : vector<8x8xbf16>, vector<8x8xbf16>, vector<8x8xf32> -> vector<8x8xf32>
    %105 = vector.extract_strided_slice %29 {offsets = [0, 24], sizes = [8, 8], strides = [1, 1]} : vector<8x96xf32> to vector<8x8xf32>
    %106 = arith.truncf %105 : vector<8x8xf32> to vector<8x8xbf16>
    %107 = vector.extract_strided_slice %29 {offsets = [0, 56], sizes = [8, 8], strides = [1, 1]} : vector<8x96xf32> to vector<8x8xf32>
    %108 = arith.truncf %107 : vector<8x8xf32> to vector<8x8xbf16>
    %109 = vector.extract_strided_slice %29 {offsets = [0, 88], sizes = [8, 8], strides = [1, 1]} : vector<8x96xf32> to vector<8x8xf32>
    %110 = arith.truncf %109 : vector<8x8xf32> to vector<8x8xbf16>
    %111 = tpu.transpose %108, [1, 0] : vector<8x8xbf16> -> vector<8x8xbf16>
    %cst_32 = arith.constant dense<0.000000e+00> : vector<8x8xf32>
    %112 = tpu.matmul %106, %111, %cst_32 {dimension_numbers = #tpu.dot_dimension_numbers<[1], [0], [0], [1], [0, 0, 1, 1], [], []>} : vector<8x8xbf16>, vector<8x8xbf16>, vector<8x8xf32> -> vector<8x8xf32>
    %cst_33 = arith.constant 0.353553385 : f32
    %113 = vector.broadcast %cst_33 : f32 to vector<8x8xf32>
    %114 = arith.mulf %112, %113 : vector<8x8xf32>
    %115 = arith.addf %114, %35 : vector<8x8xf32>
    %cst_34 = arith.constant dense<0xFF800000> : vector<8xf32>
    %116 = vector.multi_reduction <maximumf>, %115, %cst_34 [1] : vector<8x8xf32> to vector<8xf32>
    %117 = vector.shape_cast %116 : vector<8xf32> to vector<8x1xf32>
    %118 = vector.broadcast %117 : vector<8x1xf32> to vector<8x8xf32>
    %119 = arith.subf %115, %118 : vector<8x8xf32>
    %120 = math.exp %119 : vector<8x8xf32>
    %cst_35 = arith.constant dense<0.000000e+00> : vector<8xf32>
    %121 = vector.multi_reduction <add>, %120, %cst_35 [1] : vector<8x8xf32> to vector<8xf32>
    %122 = vector.shape_cast %121 : vector<8xf32> to vector<8x1xf32>
    %123 = tpu.reciprocal %122 {approx = true} : vector<8x1xf32> -> vector<8x1xf32>
    %124 = vector.broadcast %123 : vector<8x1xf32> to vector<8x8xf32>
    %125 = arith.mulf %120, %124 : vector<8x8xf32>
    %126 = arith.truncf %125 : vector<8x8xf32> to vector<8x8xbf16>
    %cst_36 = arith.constant dense<0.000000e+00> : vector<8x8xf32>
    %127 = tpu.matmul %126, %110, %cst_36 {dimension_numbers = #tpu.dot_dimension_numbers<[1], [0], [0], [1], [0, 0, 1, 1], [], []>} : vector<8x8xbf16>, vector<8x8xbf16>, vector<8x8xf32> -> vector<8x8xf32>
    %128 = tpu.concatenate %58, %81, %104, %127 in 1 : vector<8x8xf32>, vector<8x8xf32>, vector<8x8xf32>, vector<8x8xf32> -> vector<8x32xf32>
    %129 = arith.truncf %128 : vector<8x32xf32> to vector<8x32xbf16>
    %c0_37 = arith.constant 0 : index
    %c0_38 = arith.constant 0 : index
    %130 = vector.load %arg6[%c0_37, %c0_38] : memref<32x32xbf16, #tpu.memory_space<vmem>>, vector<32x32xbf16>
    %cst_39 = arith.constant dense<0.000000e+00> : vector<8x32xf32>
    %131 = tpu.matmul %129, %130, %cst_39 {dimension_numbers = #tpu.dot_dimension_numbers<[1], [0], [0], [1], [0, 0, 1, 1], [], []>} : vector<8x32xbf16>, vector<32x32xbf16>, vector<8x32xf32> -> vector<8x32xf32>
    %c0_40 = arith.constant 0 : index
    %c0_41 = arith.constant 0 : index
    %132 = vector.load %arg7[%c0_40, %c0_41] : memref<1x32xf32, #tpu.memory_space<vmem>>, vector<1x32xf32>
    %133 = vector.broadcast %132 : vector<1x32xf32> to vector<8x32xf32>
    %134 = arith.addf %131, %133 : vector<8x32xf32>
    %135 = arith.addf %1, %134 : vector<8x32xf32>
    %c0_42 = arith.constant 0 : index
    %c0_43 = arith.constant 0 : index
    %c0_44 = arith.constant 0 : index
    %136 = vector.load %arg8[%c0_42, %c0_43, %c0_44] : memref<1x8x32xf32, #tpu.memory_space<vmem>>, vector<1x8x32xf32>
    %137 = vector.shape_cast %136 : vector<1x8x32xf32> to vector<8x32xf32>
    %138 = vector.shape_cast %135 : vector<8x32xf32> to vector<1x8x32xf32>
    tpu.vector_store %arg8[%c0_42, %c0_43, %c0_44], %138 {strides = array<i32>} : memref<1x8x32xf32, #tpu.memory_space<vmem>>, vector<1x8x32xf32>,
    return
  }
  func.func @transform_0(%arg0: i32) -> (i32, i32, i32) {
    %c0_i32 = arith.constant 0 : i32
    %c0_i32_0 = arith.constant 0 : i32
    %c0_i32_1 = arith.constant 0 : i32
    return %arg0, %c0_i32, %c0_i32_0 : i32, i32, i32
  }
  func.func @transform_1(%arg0: i32) -> (i32, i32) {
    %c0_i32 = arith.constant 0 : i32
    %c0_i32_0 = arith.constant 0 : i32
    %c0_i32_1 = arith.constant 0 : i32
    return %c0_i32, %c0_i32_0 : i32, i32
  }
  func.func @transform_2(%arg0: i32) -> (i32, i32) {
    %c0_i32 = arith.constant 0 : i32
    %c0_i32_0 = arith.constant 0 : i32
    %c0_i32_1 = arith.constant 0 : i32
    return %c0_i32, %c0_i32_0 : i32, i32
  }
  func.func @transform_3(%arg0: i32) -> (i32, i32) {
    %c0_i32 = arith.constant 0 : i32
    %c0_i32_0 = arith.constant 0 : i32
    %c0_i32_1 = arith.constant 0 : i32
    return %c0_i32, %c0_i32_0 : i32, i32
  }
  func.func @transform_4(%arg0: i32) -> (i32, i32) {
    %c0_i32 = arith.constant 0 : i32
    %c0_i32_0 = arith.constant 0 : i32
    %c0_i32_1 = arith.constant 0 : i32
    return %c0_i32, %c0_i32_0 : i32, i32
  }
  func.func @transform_5(%arg0: i32) -> (i32, i32) {
    %c0_i32 = arith.constant 0 : i32
    %c0_i32_0 = arith.constant 0 : i32
    %c0_i32_1 = arith.constant 0 : i32
    return %c0_i32, %c0_i32_0 : i32, i32
  }
  func.func @transform_6(%arg0: i32) -> (i32, i32) {
    %c0_i32 = arith.constant 0 : i32
    %c0_i32_0 = arith.constant 0 : i32
    %c0_i32_1 = arith.constant 0 : i32
    return %c0_i32, %c0_i32_0 : i32, i32
  }
  func.func @transform_7(%arg0: i32) -> (i32, i32, i32) {
    %c0_i32 = arith.constant 0 : i32
    %c0_i32_0 = arith.constant 0 : i32
    %c0_i32_1 = arith.constant 0 : i32
    return %arg0, %c0_i32, %c0_i32_0 : i32, i32, i32
  }
}

module attributes {stable_mosaic.version = 11 : i64} {
  func.func @_pos_ln_kernel(%arg0: i32, %arg1: memref<1x8x32xf32, #tpu.memory_space<vmem>>, %arg2: memref<8x32xf32, #tpu.memory_space<vmem>>, %arg3: memref<1x32xf32, #tpu.memory_space<vmem>>, %arg4: memref<1x32xf32, #tpu.memory_space<vmem>>, %arg5: memref<1x8x32xf32, #tpu.memory_space<vmem>>) attributes {dimension_semantics = [#tpu.dimension_semantics<parallel>], iteration_bounds = array<i64: 4>, scalar_prefetch = 0 : i64, scratch_operands = 0 : i64, tpu.core_type = #tpu.core_type<tc>, window_params = [{transform_indices = @transform_0, window_bounds = array<i64: 1, 8, 32>}, {pipeline_mode = #tpu.pipeline_mode<synchronous>, transform_indices = @transform_1, window_bounds = array<i64: 8, 32>}, {pipeline_mode = #tpu.pipeline_mode<synchronous>, transform_indices = @transform_2, window_bounds = array<i64: 1, 32>}, {pipeline_mode = #tpu.pipeline_mode<synchronous>, transform_indices = @transform_3, window_bounds = array<i64: 1, 32>}, {transform_indices = @transform_4, window_bounds = array<i64: 1, 8, 32>}]} {
    %c0 = arith.constant 0 : index
    %c0_0 = arith.constant 0 : index
    %c0_1 = arith.constant 0 : index
    %0 = vector.load %arg1[%c0, %c0_0, %c0_1] : memref<1x8x32xf32, #tpu.memory_space<vmem>>, vector<1x8x32xf32>
    %1 = vector.shape_cast %0 : vector<1x8x32xf32> to vector<8x32xf32>
    %c0_2 = arith.constant 0 : index
    %c0_3 = arith.constant 0 : index
    %2 = vector.load %arg2[%c0_2, %c0_3] : memref<8x32xf32, #tpu.memory_space<vmem>>, vector<8x32xf32>
    %3 = arith.addf %1, %2 : vector<8x32xf32>
    %cst = arith.constant dense<0.000000e+00> : vector<8xf32>
    %4 = vector.multi_reduction <add>, %3, %cst [1] : vector<8x32xf32> to vector<8xf32>
    %5 = vector.shape_cast %4 : vector<8xf32> to vector<8x1xf32>
    %cst_4 = arith.constant 3.200000e+01 : f32
    %6 = vector.broadcast %cst_4 : f32 to vector<8x1xf32>
    %7 = arith.divf %5, %6 : vector<8x1xf32>
    %8 = vector.broadcast %7 : vector<8x1xf32> to vector<8x32xf32>
    %9 = arith.subf %3, %8 : vector<8x32xf32>
    %10 = arith.mulf %9, %9 : vector<8x32xf32>
    %cst_5 = arith.constant dense<0.000000e+00> : vector<8xf32>
    %11 = vector.multi_reduction <add>, %10, %cst_5 [1] : vector<8x32xf32> to vector<8xf32>
    %12 = vector.shape_cast %11 : vector<8xf32> to vector<8x1xf32>
    %cst_6 = arith.constant 3.200000e+01 : f32
    %13 = vector.broadcast %cst_6 : f32 to vector<8x1xf32>
    %14 = arith.divf %12, %13 : vector<8x1xf32>
    %cst_7 = arith.constant 9.99999974E-6 : f32
    %15 = vector.broadcast %cst_7 : f32 to vector<8x1xf32>
    %16 = arith.addf %14, %15 : vector<8x1xf32>
    %17 = math.rsqrt %16 : vector<8x1xf32>
    %18 = vector.broadcast %17 : vector<8x1xf32> to vector<8x32xf32>
    %19 = arith.mulf %9, %18 : vector<8x32xf32>
    %c0_8 = arith.constant 0 : index
    %c0_9 = arith.constant 0 : index
    %20 = vector.load %arg3[%c0_8, %c0_9] : memref<1x32xf32, #tpu.memory_space<vmem>>, vector<1x32xf32>
    %21 = vector.broadcast %20 : vector<1x32xf32> to vector<8x32xf32>
    %22 = arith.mulf %19, %21 : vector<8x32xf32>
    %c0_10 = arith.constant 0 : index
    %c0_11 = arith.constant 0 : index
    %23 = vector.load %arg4[%c0_10, %c0_11] : memref<1x32xf32, #tpu.memory_space<vmem>>, vector<1x32xf32>
    %24 = vector.broadcast %23 : vector<1x32xf32> to vector<8x32xf32>
    %25 = arith.addf %22, %24 : vector<8x32xf32>
    %c0_12 = arith.constant 0 : index
    %c0_13 = arith.constant 0 : index
    %c0_14 = arith.constant 0 : index
    %26 = vector.load %arg5[%c0_12, %c0_13, %c0_14] : memref<1x8x32xf32, #tpu.memory_space<vmem>>, vector<1x8x32xf32>
    %27 = vector.shape_cast %26 : vector<1x8x32xf32> to vector<8x32xf32>
    %28 = vector.shape_cast %25 : vector<8x32xf32> to vector<1x8x32xf32>
    tpu.vector_store %arg5[%c0_12, %c0_13, %c0_14], %28 {strides = array<i32>} : memref<1x8x32xf32, #tpu.memory_space<vmem>>, vector<1x8x32xf32>,
    return
  }
  func.func @transform_0(%arg0: i32) -> (i32, i32, i32) {
    %c0_i32 = arith.constant 0 : i32
    %c0_i32_0 = arith.constant 0 : i32
    %c0_i32_1 = arith.constant 0 : i32
    return %arg0, %c0_i32, %c0_i32_0 : i32, i32, i32
  }
  func.func @transform_1(%arg0: i32) -> (i32, i32) {
    %c0_i32 = arith.constant 0 : i32
    %c0_i32_0 = arith.constant 0 : i32
    %c0_i32_1 = arith.constant 0 : i32
    return %c0_i32, %c0_i32_0 : i32, i32
  }
  func.func @transform_2(%arg0: i32) -> (i32, i32) {
    %c0_i32 = arith.constant 0 : i32
    %c0_i32_0 = arith.constant 0 : i32
    %c0_i32_1 = arith.constant 0 : i32
    return %c0_i32, %c0_i32_0 : i32, i32
  }
  func.func @transform_3(%arg0: i32) -> (i32, i32) {
    %c0_i32 = arith.constant 0 : i32
    %c0_i32_0 = arith.constant 0 : i32
    %c0_i32_1 = arith.constant 0 : i32
    return %c0_i32, %c0_i32_0 : i32, i32
  }
  func.func @transform_4(%arg0: i32) -> (i32, i32, i32) {
    %c0_i32 = arith.constant 0 : i32
    %c0_i32_0 = arith.constant 0 : i32
    %c0_i32_1 = arith.constant 0 : i32
    return %arg0, %c0_i32, %c0_i32_0 : i32, i32, i32
  }
}

module attributes {stable_mosaic.version = 11 : i64} {
  func.func @_mlp_block_kernel(%arg0: i32, %arg1: memref<32x32xf32, #tpu.memory_space<vmem>>, %arg2: memref<1x32xf32, #tpu.memory_space<vmem>>, %arg3: memref<1x32xf32, #tpu.memory_space<vmem>>, %arg4: memref<32x128xbf16, #tpu.memory_space<vmem>>, %arg5: memref<1x128xf32, #tpu.memory_space<vmem>>, %arg6: memref<128x32xbf16, #tpu.memory_space<vmem>>, %arg7: memref<1x32xf32, #tpu.memory_space<vmem>>, %arg8: memref<32x32xf32, #tpu.memory_space<vmem>>) attributes {dimension_semantics = [#tpu.dimension_semantics<parallel>], iteration_bounds = array<i64: 1>, scalar_prefetch = 0 : i64, scratch_operands = 0 : i64, tpu.core_type = #tpu.core_type<tc>, window_params = [{transform_indices = @transform_0, window_bounds = array<i64: 32, 32>}, {pipeline_mode = #tpu.pipeline_mode<synchronous>, transform_indices = @transform_1, window_bounds = array<i64: 1, 32>}, {pipeline_mode = #tpu.pipeline_mode<synchronous>, transform_indices = @transform_2, window_bounds = array<i64: 1, 32>}, {pipeline_mode = #tpu.pipeline_mode<synchronous>, transform_indices = @transform_3, window_bounds = array<i64: 32, 128>}, {pipeline_mode = #tpu.pipeline_mode<synchronous>, transform_indices = @transform_4, window_bounds = array<i64: 1, 128>}, {pipeline_mode = #tpu.pipeline_mode<synchronous>, transform_indices = @transform_5, window_bounds = array<i64: 128, 32>}, {pipeline_mode = #tpu.pipeline_mode<synchronous>, transform_indices = @transform_6, window_bounds = array<i64: 1, 32>}, {transform_indices = @transform_7, window_bounds = array<i64: 32, 32>}]} {
    %c0 = arith.constant 0 : index
    %c0_0 = arith.constant 0 : index
    %0 = vector.load %arg1[%c0, %c0_0] : memref<32x32xf32, #tpu.memory_space<vmem>>, vector<32x32xf32>
    %cst = arith.constant dense<0.000000e+00> : vector<32xf32>
    %1 = vector.multi_reduction <add>, %0, %cst [1] : vector<32x32xf32> to vector<32xf32>
    %2 = vector.shape_cast %1 : vector<32xf32> to vector<32x1xf32>
    %cst_1 = arith.constant 3.200000e+01 : f32
    %3 = vector.broadcast %cst_1 : f32 to vector<32x1xf32>
    %4 = arith.divf %2, %3 : vector<32x1xf32>
    %5 = vector.broadcast %4 : vector<32x1xf32> to vector<32x32xf32>
    %6 = arith.subf %0, %5 : vector<32x32xf32>
    %7 = arith.mulf %6, %6 : vector<32x32xf32>
    %cst_2 = arith.constant dense<0.000000e+00> : vector<32xf32>
    %8 = vector.multi_reduction <add>, %7, %cst_2 [1] : vector<32x32xf32> to vector<32xf32>
    %9 = vector.shape_cast %8 : vector<32xf32> to vector<32x1xf32>
    %cst_3 = arith.constant 3.200000e+01 : f32
    %10 = vector.broadcast %cst_3 : f32 to vector<32x1xf32>
    %11 = arith.divf %9, %10 : vector<32x1xf32>
    %cst_4 = arith.constant 9.99999974E-6 : f32
    %12 = vector.broadcast %cst_4 : f32 to vector<32x1xf32>
    %13 = arith.addf %11, %12 : vector<32x1xf32>
    %14 = math.rsqrt %13 : vector<32x1xf32>
    %15 = vector.broadcast %14 : vector<32x1xf32> to vector<32x32xf32>
    %16 = arith.mulf %6, %15 : vector<32x32xf32>
    %c0_5 = arith.constant 0 : index
    %c0_6 = arith.constant 0 : index
    %17 = vector.load %arg2[%c0_5, %c0_6] : memref<1x32xf32, #tpu.memory_space<vmem>>, vector<1x32xf32>
    %18 = vector.broadcast %17 : vector<1x32xf32> to vector<32x32xf32>
    %19 = arith.mulf %16, %18 : vector<32x32xf32>
    %c0_7 = arith.constant 0 : index
    %c0_8 = arith.constant 0 : index
    %20 = vector.load %arg3[%c0_7, %c0_8] : memref<1x32xf32, #tpu.memory_space<vmem>>, vector<1x32xf32>
    %21 = vector.broadcast %20 : vector<1x32xf32> to vector<32x32xf32>
    %22 = arith.addf %19, %21 : vector<32x32xf32>
    %23 = arith.truncf %22 : vector<32x32xf32> to vector<32x32xbf16>
    %c0_9 = arith.constant 0 : index
    %c0_10 = arith.constant 0 : index
    %24 = vector.load %arg4[%c0_9, %c0_10] : memref<32x128xbf16, #tpu.memory_space<vmem>>, vector<32x128xbf16>
    %cst_11 = arith.constant dense<0.000000e+00> : vector<32x128xf32>
    %25 = tpu.matmul %23, %24, %cst_11 {dimension_numbers = #tpu.dot_dimension_numbers<[1], [0], [0], [1], [0, 0, 1, 1], [], []>} : vector<32x32xbf16>, vector<32x128xbf16>, vector<32x128xf32> -> vector<32x128xf32>
    %c0_12 = arith.constant 0 : index
    %c0_13 = arith.constant 0 : index
    %26 = vector.load %arg5[%c0_12, %c0_13] : memref<1x128xf32, #tpu.memory_space<vmem>>, vector<1x128xf32>
    %27 = vector.broadcast %26 : vector<1x128xf32> to vector<32x128xf32>
    %28 = arith.addf %25, %27 : vector<32x128xf32>
    %cst_14 = arith.constant 1.702000e+00 : f32
    %29 = vector.broadcast %cst_14 : f32 to vector<32x128xf32>
    %30 = arith.mulf %29, %28 : vector<32x128xf32>
    %31 = arith.negf %30 : vector<32x128xf32>
    %32 = math.exp %31 : vector<32x128xf32>
    %cst_15 = arith.constant 1.000000e+00 : f32
    %33 = vector.broadcast %cst_15 : f32 to vector<32x128xf32>
    %34 = arith.addf %33, %32 : vector<32x128xf32>
    %35 = arith.divf %33, %34 : vector<32x128xf32>
    %36 = arith.mulf %28, %35 : vector<32x128xf32>
    %37 = arith.truncf %36 : vector<32x128xf32> to vector<32x128xbf16>
    %c0_16 = arith.constant 0 : index
    %c0_17 = arith.constant 0 : index
    %38 = vector.load %arg6[%c0_16, %c0_17] : memref<128x32xbf16, #tpu.memory_space<vmem>>, vector<128x32xbf16>
    %cst_18 = arith.constant dense<0.000000e+00> : vector<32x32xf32>
    %39 = tpu.matmul %37, %38, %cst_18 {dimension_numbers = #tpu.dot_dimension_numbers<[1], [0], [0], [1], [0, 0, 1, 1], [], []>} : vector<32x128xbf16>, vector<128x32xbf16>, vector<32x32xf32> -> vector<32x32xf32>
    %c0_19 = arith.constant 0 : index
    %c0_20 = arith.constant 0 : index
    %40 = vector.load %arg7[%c0_19, %c0_20] : memref<1x32xf32, #tpu.memory_space<vmem>>, vector<1x32xf32>
    %41 = vector.broadcast %40 : vector<1x32xf32> to vector<32x32xf32>
    %42 = arith.addf %39, %41 : vector<32x32xf32>
    %43 = arith.addf %0, %42 : vector<32x32xf32>
    %c0_21 = arith.constant 0 : index
    %c0_22 = arith.constant 0 : index
    %44 = vector.load %arg8[%c0_21, %c0_22] : memref<32x32xf32, #tpu.memory_space<vmem>>, vector<32x32xf32>
    tpu.vector_store %arg8[%c0_21, %c0_22], %43 {strides = array<i32>} : memref<32x32xf32, #tpu.memory_space<vmem>>, vector<32x32xf32>,
    return
  }
  func.func @transform_0(%arg0: i32) -> (i32, i32) {
    %c0_i32 = arith.constant 0 : i32
    %c0_i32_0 = arith.constant 0 : i32
    return %arg0, %c0_i32 : i32, i32
  }
  func.func @transform_1(%arg0: i32) -> (i32, i32) {
    %c0_i32 = arith.constant 0 : i32
    %c0_i32_0 = arith.constant 0 : i32
    %c0_i32_1 = arith.constant 0 : i32
    return %c0_i32, %c0_i32_0 : i32, i32
  }
  func.func @transform_2(%arg0: i32) -> (i32, i32) {
    %c0_i32 = arith.constant 0 : i32
    %c0_i32_0 = arith.constant 0 : i32
    %c0_i32_1 = arith.constant 0 : i32
    return %c0_i32, %c0_i32_0 : i32, i32
  }
  func.func @transform_3(%arg0: i32) -> (i32, i32) {
    %c0_i32 = arith.constant 0 : i32
    %c0_i32_0 = arith.constant 0 : i32
    %c0_i32_1 = arith.constant 0 : i32
    return %c0_i32, %c0_i32_0 : i32, i32
  }
  func.func @transform_4(%arg0: i32) -> (i32, i32) {
    %c0_i32 = arith.constant 0 : i32
    %c0_i32_0 = arith.constant 0 : i32
    %c0_i32_1 = arith.constant 0 : i32
    return %c0_i32, %c0_i32_0 : i32, i32
  }
  func.func @transform_5(%arg0: i32) -> (i32, i32) {
    %c0_i32 = arith.constant 0 : i32
    %c0_i32_0 = arith.constant 0 : i32
    %c0_i32_1 = arith.constant 0 : i32
    return %c0_i32, %c0_i32_0 : i32, i32
  }
  func.func @transform_6(%arg0: i32) -> (i32, i32) {
    %c0_i32 = arith.constant 0 : i32
    %c0_i32_0 = arith.constant 0 : i32
    %c0_i32_1 = arith.constant 0 : i32
    return %c0_i32, %c0_i32_0 : i32, i32
  }
  func.func @transform_7(%arg0: i32) -> (i32, i32) {
    %c0_i32 = arith.constant 0 : i32
    %c0_i32_0 = arith.constant 0 : i32
    return %arg0, %c0_i32 : i32, i32
  }
}

module attributes {stable_mosaic.version = 11 : i64} {
  func.func @_ln_kernel(%arg0: memref<4x32xf32, #tpu.memory_space<vmem>>, %arg1: memref<1x32xf32, #tpu.memory_space<vmem>>, %arg2: memref<1x32xf32, #tpu.memory_space<vmem>>, %arg3: memref<4x32xf32, #tpu.memory_space<vmem>>) attributes {dimension_semantics = [], scalar_prefetch = 0 : i64, scratch_operands = 0 : i64, tpu.core_type = #tpu.core_type<tc>} {
    %c0 = arith.constant 0 : index
    %c0_0 = arith.constant 0 : index
    %0 = vector.load %arg0[%c0, %c0_0] : memref<4x32xf32, #tpu.memory_space<vmem>>, vector<4x32xf32>
    %cst = arith.constant dense<0.000000e+00> : vector<4xf32>
    %1 = vector.multi_reduction <add>, %0, %cst [1] : vector<4x32xf32> to vector<4xf32>
    %2 = vector.shape_cast %1 : vector<4xf32> to vector<4x1xf32>
    %cst_1 = arith.constant 3.200000e+01 : f32
    %3 = vector.broadcast %cst_1 : f32 to vector<4x1xf32>
    %4 = arith.divf %2, %3 : vector<4x1xf32>
    %5 = vector.broadcast %4 : vector<4x1xf32> to vector<4x32xf32>
    %6 = arith.subf %0, %5 : vector<4x32xf32>
    %7 = arith.mulf %6, %6 : vector<4x32xf32>
    %cst_2 = arith.constant dense<0.000000e+00> : vector<4xf32>
    %8 = vector.multi_reduction <add>, %7, %cst_2 [1] : vector<4x32xf32> to vector<4xf32>
    %9 = vector.shape_cast %8 : vector<4xf32> to vector<4x1xf32>
    %cst_3 = arith.constant 3.200000e+01 : f32
    %10 = vector.broadcast %cst_3 : f32 to vector<4x1xf32>
    %11 = arith.divf %9, %10 : vector<4x1xf32>
    %cst_4 = arith.constant 9.99999974E-6 : f32
    %12 = vector.broadcast %cst_4 : f32 to vector<4x1xf32>
    %13 = arith.addf %11, %12 : vector<4x1xf32>
    %14 = math.rsqrt %13 : vector<4x1xf32>
    %15 = vector.broadcast %14 : vector<4x1xf32> to vector<4x32xf32>
    %16 = arith.mulf %6, %15 : vector<4x32xf32>
    %c0_5 = arith.constant 0 : index
    %c0_6 = arith.constant 0 : index
    %17 = vector.load %arg1[%c0_5, %c0_6] : memref<1x32xf32, #tpu.memory_space<vmem>>, vector<1x32xf32>
    %18 = vector.broadcast %17 : vector<1x32xf32> to vector<4x32xf32>
    %19 = arith.mulf %16, %18 : vector<4x32xf32>
    %c0_7 = arith.constant 0 : index
    %c0_8 = arith.constant 0 : index
    %20 = vector.load %arg2[%c0_7, %c0_8] : memref<1x32xf32, #tpu.memory_space<vmem>>, vector<1x32xf32>
    %21 = vector.broadcast %20 : vector<1x32xf32> to vector<4x32xf32>
    %22 = arith.addf %19, %21 : vector<4x32xf32>
    %c0_9 = arith.constant 0 : index
    %c0_10 = arith.constant 0 : index
    %23 = vector.load %arg3[%c0_9, %c0_10] : memref<4x32xf32, #tpu.memory_space<vmem>>, vector<4x32xf32>
    tpu.vector_store %arg3[%c0_9, %c0_10], %22 {strides = array<i32>} : memref<4x32xf32, #tpu.memory_space<vmem>>, vector<4x32xf32>,
    return
  }
}

</mosaic_0001>

<llo_original>
// kernel: encode_image.7
$region0: #{encode_image.7}
  #allocation0 [shape = 'u32[]', space=smem, size = 0x4, offset = 0x4, fixed_abs, tag = 'smem constant byte address 0x4 - core index']
  #allocation1 [shape = 'u32[144,128]{1,0:T(1,128)}', space=vmem, size = 0x12000, scoped, tag = 'internal scratch']
  %s0 = inlined_call_operand.vmem [shape: f32[16,192], index: 0, kind: input, shape index: {}]
  %s1 = inlined_call_operand.vmem [shape: bf16[192,32], index: 1, kind: input, shape index: {}]
  %s2 = inlined_call_operand.vmem [shape: f32[16,32], index: 2, kind: output, shape index: {}]
  %s3 = sld [smem:[#allocation0]]
  $region18: #{encode_image.7} parent=0
    _
  %s5 = ssub.s32 1, %s3
  %s6 = scalar_select 0, %s5, %s3
  // Predicated region
  $region2: #{encode_image.7} parent=0 // pred_check
    _
  $region3: #{encode_image.7} parent=0 // pred_check_branch
    %8 = sbr.rel (0) target = $region5
  $region4: #{encode_image.7} parent=0 // pred_region
    _
  $region5: #{encode_image.7} parent=0 // pred_fallthru
    _
  // Predicated region
  $region6: #{encode_image.7} parent=0 // pred_check
    _
  $region7: #{encode_image.7} parent=0 // pred_check_branch
    %10 = sbr.rel (0) target = $region9
  $region8: #{encode_image.7} parent=0 // pred_region
    _
  $region9: #{encode_image.7} parent=0 // pred_fallthru
    _
  %v12 = vld [vmem:[%s0] sm:$0xff]
  %v13 = vld [vmem:[%s0 + $0x8] sm:$0xff]
  %v14 = vld [vmem:[%s0 + $0x10] sm:$0xff]
  %v15 = vld [vmem:[%s0 + $0x18] sm:$0xff]
  %v16 = vpack.c.bf16 %v14, %v12
  %v17 = vpack.c.bf16 %v15, %v13
  %v18 = vld [vmem:[%s1] sm:$0xf]
  %v19 = vld [vmem:[%s1 + $0x4] sm:$0xf]
  %v20 = vld [vmem:[%s1 + $0x8] sm:$0xf]
  %v21 = vld [vmem:[%s1 + $0xc] sm:$0xf]
  %v22 = vld [vmem:[%s1 + $0x10] sm:$0xf]
  %v23 = vld [vmem:[%s1 + $0x14] sm:$0xf]
  %v24 = vld [vmem:[%s1 + $0x18] sm:$0xf]
  %v25 = vld [vmem:[%s1 + $0x1c] sm:$0xf]
  %v26 = vld [vmem:[%s1 + $0x20] sm:$0xf]
  %v27 = vld [vmem:[%s1 + $0x24] sm:$0xf]
  %v28 = vld [vmem:[%s1 + $0x28] sm:$0xf]
  %v29 = vld [vmem:[%s1 + $0x2c] sm:$0xf]
  %v30 = vld [vmem:[%s1 + $0x30] sm:$0xf]
  %v31 = vld [vmem:[%s1 + $0x34] sm:$0xf]
  %v32 = vld [vmem:[%s1 + $0x38] sm:$0xf]
  %v33 = vld [vmem:[%s1 + $0x3c] sm:$0xf]
  %v34 = vld [vmem:[%s1 + $0x40] sm:$0xf]
  %v35 = vld [vmem:[%s1 + $0x44] sm:$0xf]
  %v36 = vld [vmem:[%s1 + $0x48] sm:$0xf]
  %v37 = vld [vmem:[%s1 + $0x4c] sm:$0xf]
  %v38 = vld [vmem:[%s1 + $0x50] sm:$0xf]
  %v39 = vld [vmem:[%s1 + $0x54] sm:$0xf]
  %v40 = vld [vmem:[%s1 + $0x58] sm:$0xf]
  %v41 = vld [vmem:[%s1 + $0x5c] sm:$0xf]
  %v66 = vunpack.c.l.b16 %v18
  %v67 = vunpack.c.l.b16 %v19
  %v68 = vunpack.c.l.b16 %v20
  %v69 = vunpack.c.l.b16 %v21
  %v70 = vunpack.c.l.b16 %v22
  %v71 = vunpack.c.l.b16 %v23
  %v72 = vunpack.c.l.b16 %v24
  %v73 = vunpack.c.l.b16 %v25
  %v74 = vunpack.c.l.b16 %v26
  %v75 = vunpack.c.l.b16 %v27
  %v76 = vunpack.c.l.b16 %v28
  %v77 = vunpack.c.l.b16 %v29
  %v78 = vunpack.c.l.b16 %v30
  %v79 = vunpack.c.l.b16 %v31
  %v80 = vunpack.c.l.b16 %v32
  %v81 = vunpack.c.l.b16 %v33
  %v82 = vunpack.c.l.b16 %v34
  %v83 = vunpack.c.l.b16 %v35
  %v84 = vunpack.c.l.b16 %v36
  %v85 = vunpack.c.l.b16 %v37
  %v86 = vunpack.c.l.b16 %v38
  %v87 = vunpack.c.l.b16 %v39
  %v88 = vunpack.c.l.b16 %v40
  %v89 = vunpack.c.l.b16 %v41
  %v90 = vpack.c.b16 %v67, %v66
  %v91 = vpack.c.b16 %v69, %v68
  %v92 = vpack.c.b16 %v71, %v70
  %v93 = vpack.c.b16 %v73, %v72
  %v94 = vpack.c.b16 %v75, %v74
  %v95 = vpack.c.b16 %v77, %v76
  %v96 = vpack.c.b16 %v79, %v78
  %v97 = vpack.c.b16 %v81, %v80
  %v98 = vpack.c.b16 %v83, %v82
  %v99 = vpack.c.b16 %v85, %v84
  %v100 = vpack.c.b16 %v87, %v86
  %v101 = vpack.c.b16 %v89, %v88
  %vm114 = vcmask 523264
  %v116 = vsel %vm114, %v17, 0
  %118 = vmatprep.subr.bf16.mxu0 0
  %119 = vmatpush1.bf16.msra.mxu0 %v90
  %120 = vmatprep.subr.bf16.mxu0 0
  %121 = vmatpush1.bf16.msra.mxu0 %v91
  %122 = vmatprep.subr.bf16.mxu0 0
  %123 = vmatpush1.bf16.msra.mxu0 %v92
  %124 = vmatprep.subr.bf16.mxu0 0
  %125 = vmatpush1.bf16.msra.mxu0 %v93
  %126 = vmatprep.subr.bf16.mxu0 0
  %127 = vmatpush1.bf16.msra.mxu0 %v94
  %128 = vmatprep.subr.bf16.mxu0 0
  %129 = vmatpush1.bf16.msra.mxu0 %v95
  %130 = vmatprep.subr.bf16.mxu0 0
  %131 = vmatpush1.bf16.msra.mxu0 %v96
  %132 = vmatprep.subr.bf16.mxu0 0
  %133 = vmatpush1.bf16.msra.mxu0 %v97
  %134 = vmatprep.subr.bf16.mxu0 0
  %135 = vmatpush1.bf16.msra.mxu0 %v98
  %136 = vmatprep.subr.bf16.mxu0 0
  %137 = vmatpush1.bf16.msra.mxu0 %v99
  %138 = vmatprep.subr.bf16.mxu0 0
  %139 = vmatpush1.bf16.msra.mxu0 %v100
  %140 = vmatprep.subr.bf16.mxu0 0
  %141 = vmatpush1.bf16.msra.mxu0 %v101
  %142 = vmatprep.subr.bf16.mxu0 0
  %143 = vmatpush1.bf16.msra.mxu0 0
  %144 = vmatprep.subr.bf16.mxu0 0
  %145 = vmatpush1.bf16.msra.mxu0 0
  %146 = vmatprep.subr.bf16.mxu0 0
  %147 = vmatpush1.bf16.msra.mxu0 0
  %148 = vmatprep.subr.bf16.mxu0 0
  %149 = vmatpush1.bf16.msra.mxu0 0
  %150 = vmatprep.mubr.bf16.mxu0 %v116
  %151 = vmatmul.mubr.bf16.gmra.mrb[0].mxu0 %v16
  %v152 = vpop.f32.mrb[0].mxu0
  %v153 = vadd.f32 0.0, %v152
  %v154 = vpop.f32.mrb[0].mxu0
  %v155 = vpop.f32.mrb[0].mxu0
  %v156 = vadd.f32 0.0, %v155
  %v157 = vpop.f32.mrb[0].mxu0
  %158 = vdwg.mxu0
  %vm159 = vcmask 261120
  %160 = vst.msk [vmem:[%s2] sm:$0xff] %vm159, %v153
  %161 = vst.msk [vmem:[%s2 + $0x8] sm:$0xff] %vm159, %v156
  // Predicated region
  $region10: #{encode_image.7} parent=0 // pred_check
    _
  $region11: #{encode_image.7} parent=0 // pred_check_branch
    %163 = sbr.rel (0) target = $region13
  $region12: #{encode_image.7} parent=0 // pred_region
    _
  $region13: #{encode_image.7} parent=0 // pred_fallthru
    _
  // Predicated region
  $region14: #{encode_image.7} parent=0 // pred_check
    _
  $region15: #{encode_image.7} parent=0 // pred_check_branch
    %165 = sbr.rel (0) target = $region17
  $region16: #{encode_image.7} parent=0 // pred_region
    _
  $region17: #{encode_image.7} parent=0 // pred_fallthru
    _

// kernel: encode_image.8
$region0: #{encode_image.8}
  #allocation0 [shape = 'u32[]', space=smem, size = 0x4, offset = 0x4, fixed_abs, tag = 'smem constant byte address 0x4 - core index']
  #allocation1 [shape = 'u32[144,128]{1,0:T(1,128)}', space=vmem, size = 0x12000, scoped, tag = 'internal scratch']
  %s0 = inlined_call_operand.vmem [shape: f32[4,8,32], index: 0, kind: input, shape index: {}]
  %s1 = inlined_call_operand.vmem [shape: f32[8,32], index: 1, kind: input, shape index: {}]
  %s2 = inlined_call_operand.vmem [shape: f32[1,32], index: 2, kind: input, shape index: {}]
  %s3 = inlined_call_operand.vmem [shape: f32[1,32], index: 3, kind: input, shape index: {}]
  %s4 = inlined_call_operand.vmem [shape: f32[4,8,32], index: 4, kind: output, shape index: {}]
  %s5 = sld [smem:[#allocation0]]
  $region49: #{encode_image.8} parent=0
    _
  %s7 = ssub.s32 1, %s5
  %s8 = scalar_select 0, %s7, %s5
  loop: start=0, step=1, limit=6
  $region2: #{encode_image.8} parent=0 // loop_pre_header
    _
  $region3: #{encode_image.8} parent=0 // loop_header
    %s10 = sphi 0, %s14
    %p11 = scmp.ge.s32.totalorder %s10, 6
    %s20 = sphi 0, %s22
    %s23 = sphi 0, %s20
    %s24 = sphi 0, %s23
    %s40 = sphi 0, %s24
    %s44 = sphi 0, %s44
    %s46 = sphi 0, %s44
    %s47 = sphi 0, %s46
    %s61 = sphi 0, %s47
    %s65 = sphi 0, %s65
    %s67 = sphi 0, %s65
    %s68 = sphi 0, %s67
    %s82 = sphi 0, %s68
    %s86 = sphi 0, %s86
    %s88 = sphi 0, %s86
    %s89 = sphi 0, %s88
    %s103 = sphi 0, %s89
    %s109 = sphi 0, %s111
    %s112 = sphi 0, %s109
    %s113 = sphi 0, %s112
    %s129 = sphi 0, %s113
  $region4: #{encode_image.8} parent=0 // loop_header_branch
    %13 = sbr.rel (%p11) target = $region8
  $region5: #{encode_image.8} parent=0 // loop_body
    %s15 = ssub.s32 %s10, 1
    %s16 = ssub.s32 %s10, 2
    %s17 = sadd.s32 %s10, 1
    %s18 = ssub.s32 %s10, %s17
    %p19 = scmp.eq.s32.totalorder %s18, 0
    %s21 = sadd.s32 %s20, 1
    %s22 = scalar_select %p19, %s20, %s21
    %p25 = pneg %p19
    %p26 = scmp.eq.s32.totalorder %s10, 3
    %p27 = por %p25, %p26
    %p28 = scmp.ne.s32.totalorder %s20, %s23
    %p29 = scmp.eq.s32.totalorder %s10, 0
    %p30 = por %p28, %p29
    %p31 = scmp.ne.s32.totalorder %s20, %s23
    %p32 = scmp.eq.s32.totalorder %s15, 3
    %p33 = por %p31, %p32
    %p34 = scmp.ne.s32.totalorder %s23, %s24
    %p35 = scmp.eq.s32.totalorder %s15, 0
    %p36 = por %p34, %p35
    %p37 = scmp.ne.s32.totalorder %s23, %s24
    %p38 = scmp.eq.s32.totalorder %s16, 3
    %p39 = por %p37, %p38
    %p41 = scmp.ne.s32.totalorder %s24, %s40
    %p42 = scmp.eq.s32.totalorder %s16, 0
    %p43 = por %p41, %p42
    %s45 = sadd.s32 %s44, 1
    %p48 = scmp.eq.s32.totalorder %s10, 3
    %p49 = scmp.ne.s32.totalorder %s44, %s46
    %p50 = scmp.eq.s32.totalorder %s10, 0
    %p51 = por %p49, %p50
    %p52 = scmp.ne.s32.totalorder %s44, %s46
    %p53 = scmp.eq.s32.totalorder %s15, 3
    %p54 = por %p52, %p53
    %p55 = scmp.ne.s32.totalorder %s46, %s47
    %p56 = scmp.eq.s32.totalorder %s15, 0
    %p57 = por %p55, %p56
    %p58 = scmp.ne.s32.totalorder %s46, %s47
    %p59 = scmp.eq.s32.totalorder %s16, 3
    %p60 = por %p58, %p59
    %p62 = scmp.ne.s32.totalorder %s47, %s61
    %p63 = scmp.eq.s32.totalorder %s16, 0
    %p64 = por %p62, %p63
    %s66 = sadd.s32 %s65, 1
    %p69 = scmp.eq.s32.totalorder %s10, 3
    %p70 = scmp.ne.s32.totalorder %s65, %s67
    %p71 = scmp.eq.s32.totalorder %s10, 0
    %p72 = por %p70, %p71
    %p73 = scmp.ne.s32.totalorder %s65, %s67
    %p74 = scmp.eq.s32.totalorder %s15, 3
    %p75 = por %p73, %p74
    %p76 = scmp.ne.s32.totalorder %s67, %s68
    %p77 = scmp.eq.s32.totalorder %s15, 0
    %p78 = por %p76, %p77
    %p79 = scmp.ne.s32.totalorder %s67, %s68
    %p80 = scmp.eq.s32.totalorder %s16, 3
    %p81 = por %p79, %p80
    %p83 = scmp.ne.s32.totalorder %s68, %s82
    %p84 = scmp.eq.s32.totalorder %s16, 0
    %p85 = por %p83, %p84
    %s87 = sadd.s32 %s86, 1
    %p90 = scmp.eq.s32.totalorder %s10, 3
    %p91 = scmp.ne.s32.totalorder %s86, %s88
    %p92 = scmp.eq.s32.totalorder %s10, 0
    %p93 = por %p91, %p92
    %p94 = scmp.ne.s32.totalorder %s86, %s88
    %p95 = scmp.eq.s32.totalorder %s15, 3
    %p96 = por %p94, %p95
    %p97 = scmp.ne.s32.totalorder %s88, %s89
    %p98 = scmp.eq.s32.totalorder %s15, 0
    %p99 = por %p97, %p98
    %p100 = scmp.ne.s32.totalorder %s88, %s89
    %p101 = scmp.eq.s32.totalorder %s16, 3
    %p102 = por %p100, %p101
    %p104 = scmp.ne.s32.totalorder %s89, %s103
    %p105 = scmp.eq.s32.totalorder %s16, 0
    %p106 = por %p104, %p105
    %s107 = ssub.s32 %s10, %s17
    %p108 = scmp.eq.s32.totalorder %s107, 0
    %s110 = sadd.s32 %s109, 1
    %s111 = scalar_select %p108, %s109, %s110
    %p114 = pneg %p108
    %p115 = scmp.eq.s32.totalorder %s10, 3
    %p116 = por %p114, %p115
    %p117 = scmp.ne.s32.totalorder %s109, %s112
    %p118 = scmp.eq.s32.totalorder %s10, 0
    %p119 = por %p117, %p118
    %p120 = scmp.ne.s32.totalorder %s109, %s112
    %p121 = scmp.eq.s32.totalorder %s15, 3
    %p122 = por %p120, %p121
    %p123 = scmp.ne.s32.totalorder %s112, %s113
    %p124 = scmp.eq.s32.totalorder %s15, 0
    %p125 = por %p123, %p124
    %p126 = scmp.ne.s32.totalorder %s112, %s113
    %p127 = scmp.eq.s32.totalorder %s16, 3
    %p128 = por %p126, %p127
    %p130 = scmp.ne.s32.totalorder %s113, %s129
    %p131 = scmp.eq.s32.totalorder %s16, 0
    %p132 = por %p130, %p131
    %p133 = scmp.le.s32.totalorder 1, %s10
    %p134 = scmp.lt.s32.totalorder %s10, 5
    %p135 = pnand %p133, %p134
    %p136 = pneg %p135
    // Predicated region
    $region9: #{encode_image.8} parent=5 // pred_check
      _
    $region10: #{encode_image.8} parent=5 // pred_check_branch
      %138 = sbr.rel (%p135) target = $region12
    $region11: #{encode_image.8} parent=5 // pred_region
      %s139 = ssub.s32 %s10, 1
      // Predicated region
      $region13: #{encode_image.8} parent=11 // pred_check
        %p140 = pneg %p57
      $region14: #{encode_image.8} parent=11 // pred_check_branch
        %142 = sbr.rel (%p140) target = $region16
      $region15: #{encode_image.8} parent=11 // pred_region
        _
      $region16: #{encode_image.8} parent=11 // pred_fallthru
        _
      // Predicated region
      $region17: #{encode_image.8} parent=11 // pred_check
        %p143 = pneg %p78
      $region18: #{encode_image.8} parent=11 // pred_check_branch
        %145 = sbr.rel (%p143) target = $region20
      $region19: #{encode_image.8} parent=11 // pred_region
        _
      $region20: #{encode_image.8} parent=11 // pred_fallthru
        _
      // Predicated region
      $region21: #{encode_image.8} parent=11 // pred_check
        %p146 = pneg %p99
      $region22: #{encode_image.8} parent=11 // pred_check_branch
        %148 = sbr.rel (%p146) target = $region24
      $region23: #{encode_image.8} parent=11 // pred_region
        _
      $region24: #{encode_image.8} parent=11 // pred_fallthru
        _
    $region12: #{encode_image.8} parent=5 // pred_fallthru
      _
    %p149 = scmp.lt.s32.totalorder %s10, 4
    // Predicated region
    $region25: #{encode_image.8} parent=5 // pred_check
      %p150 = pneg %p149
    $region26: #{encode_image.8} parent=5 // pred_check_branch
      %152 = sbr.rel (%p150) target = $region28
    $region27: #{encode_image.8} parent=5 // pred_region
      // Predicated region
      $region29: #{encode_image.8} parent=27 // pred_check
        %p153 = pneg %p30
      $region30: #{encode_image.8} parent=27 // pred_check_branch
        %155 = sbr.rel (%p153) target = $region32
      $region31: #{encode_image.8} parent=27 // pred_region
        %p156 = scmp.lt.s32.totalorder %s10, 3
        %s157 = scalar_select %p156, %s10, 3
        %s158 = smul.addr %s157, 8
        %s159 = scalar_lea.vmem %s0, %s158
      $region32: #{encode_image.8} parent=27 // pred_fallthru
        _
    $region28: #{encode_image.8} parent=5 // pred_fallthru
      _
    %p160 = scmp.le.s32.totalorder 1, %s10
    %p161 = scmp.lt.s32.totalorder %s10, 5
    %p162 = pnand %p160, %p161
    %p163 = pneg %p162
    // Predicated region
    $region33: #{encode_image.8} parent=5 // pred_check
      _
    $region34: #{encode_image.8} parent=5 // pred_check_branch
      %165 = sbr.rel (%p162) target = $region36
    $region35: #{encode_image.8} parent=5 // pred_region
      %s166 = ssub.s32 %s10, 1
      %p167 = scmp.lt.s32.totalorder %s15, 3
      %s168 = scalar_select %p167, %s15, 3
      %s169 = smul.addr %s168, 8
      %s170 = scalar_lea.vmem %s0, %s169
      %p171 = pneg %p36
      %p172 = pneg %p33
      %p173 = pneg %p57
      %p174 = pneg %p54
      %p175 = pneg %p78
      %p176 = pneg %p75
      %p177 = pneg %p99
      %p178 = pneg %p96
      %p179 = pneg %p125
      %p180 = pneg %p122
      %p181 = scmp.lt.s32.totalorder %s15, 3
      %s182 = scalar_select %p181, %s15, 3
      %s183 = smul.addr %s182, 8
      %s184 = scalar_lea.vmem %s4, %s183
      %p185 = scmp.lt.s32.totalorder %s15, 3
      %s186 = scalar_select %p185, %s15, 3
      %s187 = smul.addr %s186, 8
      %s188 = scalar_lea.vmem %s0, %s187
      %p189 = scmp.lt.s32.totalorder %s15, 3
      %s190 = scalar_select %p189, %s15, 3
      %s191 = smul.addr %s190, 8
      %s192 = scalar_lea.vmem %s4, %s191
      %v193 = vld [vmem:[%s188] sm:$0xff]
      %v194 = vld [vmem:[%s1] sm:$0xff]
      %v195 = vadd.f32 %v193, %v194
      %vm196 = vcmask 261120
      %v197 = vsel %vm196, %v195, 0.0
      %198 = vadd.xlane.f32.xlu0 %v197
      %v199 = vpop.xlane.xlu0 %198
      %v200 = vrcp.pop 32.0
      %v201 = vmul.f32 %v199, %v200
      %v202 = vsub.f32 %v195, %v201
      %v203 = vmul.f32 %v202, %v202
      %v204 = vsel %vm196, %v203, 0.0
      %205 = vadd.xlane.f32.xlu0 %v204
      %v206 = vpop.xlane.xlu0 %205
      %v207 = vmul.f32 %v206, %v200
      %v208 = vadd.f32 %v207, 1e-05
      %v209 = vrsqrt.pop %v208
      %v210 = vmul.f32 %v202, %v209
      %v211 = vld [vmem:[%s2] sm:$0x1]
      %v213 = vlaneseq
      %v214 = vshrl.u32 %v213, 7
      %v215 = vsub.s32 0, %v214
      %v216 = vrot.slane %v211, %v215
      %v218 = vmul.f32 %v210, %v216
      %v219 = vld [vmem:[%s3] sm:$0x1]
      %v221 = vlaneseq
      %v222 = vshrl.u32 %v221, 7
      %v223 = vsub.s32 0, %v222
      %v224 = vrot.slane %v219, %v223
      %v226 = vadd.f32 %v218, %v224
      %227 = vst.msk [vmem:[%s192] sm:$0xff] %vm196, %v226
      %p228 = scmp.lt.s32.totalorder %s15, 3
      %s229 = scalar_select %p228, %s15, 3
      %s230 = smul.addr %s229, 8
      %s231 = scalar_lea.vmem %s4, %s230
      // Predicated region
      $region37: #{encode_image.8} parent=35 // pred_check
        %p232 = pneg %p122
      $region38: #{encode_image.8} parent=35 // pred_check_branch
        %234 = sbr.rel (%p232) target = $region40
      $region39: #{encode_image.8} parent=35 // pred_region
        _
      $region40: #{encode_image.8} parent=35 // pred_fallthru
        _
    $region36: #{encode_image.8} parent=5 // pred_fallthru
      _
    %p235 = scmp.le.s32.totalorder 2, %s10
    // Predicated region
    $region41: #{encode_image.8} parent=5 // pred_check
      %p236 = pneg %p235
    $region42: #{encode_image.8} parent=5 // pred_check_branch
      %238 = sbr.rel (%p236) target = $region44
    $region43: #{encode_image.8} parent=5 // pred_region
      %s239 = ssub.s32 %s10, 2
      // Predicated region
      $region45: #{encode_image.8} parent=43 // pred_check
        %p240 = pneg %p128
      $region46: #{encode_image.8} parent=43 // pred_check_branch
        %242 = sbr.rel (%p240) target = $region48
      $region47: #{encode_image.8} parent=43 // pred_region
        %p243 = scmp.lt.s32.totalorder %s16, 3
        %s244 = scalar_select %p243, %s16, 3
        %s245 = smul.addr %s244, 8
        %s246 = scalar_lea.vmem %s4, %s245
      $region48: #{encode_image.8} parent=43 // pred_fallthru
        _
    $region44: #{encode_image.8} parent=5 // pred_fallthru
      _
  $region6: #{encode_image.8} parent=0 // loop_footer
    %s14 = sadd.s32 1, %s10
  $region7: #{encode_image.8} parent=0 // loop_footer_branch
    %9 = sbr.rel target = $region3
  $region8: #{encode_image.8} parent=0 // loop_exit
    _

// kernel: encode_image.9
$region0: #{encode_image.9}
  #allocation0 [shape = 'u32[]', space=smem, size = 0x4, offset = 0x4, fixed_abs, tag = 'smem constant byte address 0x4 - core index']
  #allocation1 [shape = 'u32[144,128]{1,0:T(1,128)}', space=vmem, size = 0x12000, scoped, tag = 'internal scratch']
  %s0 = inlined_call_operand.vmem [shape: f32[4,8,32], index: 0, kind: input, shape index: {}]
  %s1 = inlined_call_operand.vmem [shape: f32[1,32], index: 1, kind: input, shape index: {}]
  %s2 = inlined_call_operand.vmem [shape: f32[1,32], index: 2, kind: input, shape index: {}]
  %s3 = inlined_call_operand.vmem [shape: bf16[32,96], index: 3, kind: input, shape index: {}]
  %s4 = inlined_call_operand.vmem [shape: f32[1,96], index: 4, kind: input, shape index: {}]
  %s5 = inlined_call_operand.vmem [shape: bf16[32,32], index: 5, kind: input, shape index: {}]
  %s6 = inlined_call_operand.vmem [shape: f32[1,32], index: 6, kind: input, shape index: {}]
  %s7 = inlined_call_operand.vmem [shape: f32[4,8,32], index: 7, kind: output, shape index: {}]
  %s8 = sld [smem:[#allocation0]]
  $region61: #{encode_image.9} parent=0
    _
  %s10 = ssub.s32 1, %s8
  %s11 = scalar_select 0, %s10, %s8
  loop: start=0, step=1, limit=6
  $region2: #{encode_image.9} parent=0 // loop_pre_header
    _
  $region3: #{encode_image.9} parent=0 // loop_header
    %s13 = sphi 0, %s17
    %p14 = scmp.ge.s32.totalorder %s13, 6
    %s23 = sphi 0, %s25
    %s26 = sphi 0, %s23
    %s27 = sphi 0, %s26
    %s43 = sphi 0, %s27
    %s47 = sphi 0, %s47
    %s49 = sphi 0, %s47
    %s50 = sphi 0, %s49
    %s64 = sphi 0, %s50
    %s68 = sphi 0, %s68
    %s70 = sphi 0, %s68
    %s71 = sphi 0, %s70
    %s85 = sphi 0, %s71
    %s89 = sphi 0, %s89
    %s91 = sphi 0, %s89
    %s92 = sphi 0, %s91
    %s106 = sphi 0, %s92
    %s110 = sphi 0, %s110
    %s112 = sphi 0, %s110
    %s113 = sphi 0, %s112
    %s127 = sphi 0, %s113
    %s131 = sphi 0, %s131
    %s133 = sphi 0, %s131
    %s134 = sphi 0, %s133
    %s148 = sphi 0, %s134
    %s152 = sphi 0, %s152
    %s154 = sphi 0, %s152
    %s155 = sphi 0, %s154
    %s169 = sphi 0, %s155
    %s175 = sphi 0, %s177
    %s178 = sphi 0, %s175
    %s179 = sphi 0, %s178
    %s195 = sphi 0, %s179
  $region4: #{encode_image.9} parent=0 // loop_header_branch
    %16 = sbr.rel (%p14) target = $region8
  $region5: #{encode_image.9} parent=0 // loop_body
    %s18 = ssub.s32 %s13, 1
    %s19 = ssub.s32 %s13, 2
    %s20 = sadd.s32 %s13, 1
    %s21 = ssub.s32 %s13, %s20
    %p22 = scmp.eq.s32.totalorder %s21, 0
    %s24 = sadd.s32 %s23, 1
    %s25 = scalar_select %p22, %s23, %s24
    %p28 = pneg %p22
    %p29 = scmp.eq.s32.totalorder %s13, 3
    %p30 = por %p28, %p29
    %p31 = scmp.ne.s32.totalorder %s23, %s26
    %p32 = scmp.eq.s32.totalorder %s13, 0
    %p33 = por %p31, %p32
    %p34 = scmp.ne.s32.totalorder %s23, %s26
    %p35 = scmp.eq.s32.totalorder %s18, 3
    %p36 = por %p34, %p35
    %p37 = scmp.ne.s32.totalorder %s26, %s27
    %p38 = scmp.eq.s32.totalorder %s18, 0
    %p39 = por %p37, %p38
    %p40 = scmp.ne.s32.totalorder %s26, %s27
    %p41 = scmp.eq.s32.totalorder %s19, 3
    %p42 = por %p40, %p41
    %p44 = scmp.ne.s32.totalorder %s27, %s43
    %p45 = scmp.eq.s32.totalorder %s19, 0
    %p46 = por %p44, %p45
    %s48 = sadd.s32 %s47, 1
    %p51 = scmp.eq.s32.totalorder %s13, 3
    %p52 = scmp.ne.s32.totalorder %s47, %s49
    %p53 = scmp.eq.s32.totalorder %s13, 0
    %p54 = por %p52, %p53
    %p55 = scmp.ne.s32.totalorder %s47, %s49
    %p56 = scmp.eq.s32.totalorder %s18, 3
    %p57 = por %p55, %p56
    %p58 = scmp.ne.s32.totalorder %s49, %s50
    %p59 = scmp.eq.s32.totalorder %s18, 0
    %p60 = por %p58, %p59
    %p61 = scmp.ne.s32.totalorder %s49, %s50
    %p62 = scmp.eq.s32.totalorder %s19, 3
    %p63 = por %p61, %p62
    %p65 = scmp.ne.s32.totalorder %s50, %s64
    %p66 = scmp.eq.s32.totalorder %s19, 0
    %p67 = por %p65, %p66
    %s69 = sadd.s32 %s68, 1
    %p72 = scmp.eq.s32.totalorder %s13, 3
    %p73 = scmp.ne.s32.totalorder %s68, %s70
    %p74 = scmp.eq.s32.totalorder %s13, 0
    %p75 = por %p73, %p74
    %p76 = scmp.ne.s32.totalorder %s68, %s70
    %p77 = scmp.eq.s32.totalorder %s18, 3
    %p78 = por %p76, %p77
    %p79 = scmp.ne.s32.totalorder %s70, %s71
    %p80 = scmp.eq.s32.totalorder %s18, 0
    %p81 = por %p79, %p80
    %p82 = scmp.ne.s32.totalorder %s70, %s71
    %p83 = scmp.eq.s32.totalorder %s19, 3
    %p84 = por %p82, %p83
    %p86 = scmp.ne.s32.totalorder %s71, %s85
    %p87 = scmp.eq.s32.totalorder %s19, 0
    %p88 = por %p86, %p87
    %s90 = sadd.s32 %s89, 1
    %p93 = scmp.eq.s32.totalorder %s13, 3
    %p94 = scmp.ne.s32.totalorder %s89, %s91
    %p95 = scmp.eq.s32.totalorder %s13, 0
    %p96 = por %p94, %p95
    %p97 = scmp.ne.s32.totalorder %s89, %s91
    %p98 = scmp.eq.s32.totalorder %s18, 3
    %p99 = por %p97, %p98
    %p100 = scmp.ne.s32.totalorder %s91, %s92
    %p101 = scmp.eq.s32.totalorder %s18, 0
    %p102 = por %p100, %p101
    %p103 = scmp.ne.s32.totalorder %s91, %s92
    %p104 = scmp.eq.s32.totalorder %s19, 3
    %p105 = por %p103, %p104
    %p107 = scmp.ne.s32.totalorder %s92, %s106
    %p108 = scmp.eq.s32.totalorder %s19, 0
    %p109 = por %p107, %p108
    %s111 = sadd.s32 %s110, 1
    %p114 = scmp.eq.s32.totalorder %s13, 3
    %p115 = scmp.ne.s32.totalorder %s110, %s112
    %p116 = scmp.eq.s32.totalorder %s13, 0
    %p117 = por %p115, %p116
    %p118 = scmp.ne.s32.totalorder %s110, %s112
    %p119 = scmp.eq.s32.totalorder %s18, 3
    %p120 = por %p118, %p119
    %p121 = scmp.ne.s32.totalorder %s112, %s113
    %p122 = scmp.eq.s32.totalorder %s18, 0
    %p123 = por %p121, %p122
    %p124 = scmp.ne.s32.totalorder %s112, %s113
    %p125 = scmp.eq.s32.totalorder %s19, 3
    %p126 = por %p124, %p125
    %p128 = scmp.ne.s32.totalorder %s113, %s127
    %p129 = scmp.eq.s32.totalorder %s19, 0
    %p130 = por %p128, %p129
    %s132 = sadd.s32 %s131, 1
    %p135 = scmp.eq.s32.totalorder %s13, 3
    %p136 = scmp.ne.s32.totalorder %s131, %s133
    %p137 = scmp.eq.s32.totalorder %s13, 0
    %p138 = por %p136, %p137
    %p139 = scmp.ne.s32.totalorder %s131, %s133
    %p140 = scmp.eq.s32.totalorder %s18, 3
    %p141 = por %p139, %p140
    %p142 = scmp.ne.s32.totalorder %s133, %s134
    %p143 = scmp.eq.s32.totalorder %s18, 0
    %p144 = por %p142, %p143
    %p145 = scmp.ne.s32.totalorder %s133, %s134
    %p146 = scmp.eq.s32.totalorder %s19, 3
    %p147 = por %p145, %p146
    %p149 = scmp.ne.s32.totalorder %s134, %s148
    %p150 = scmp.eq.s32.totalorder %s19, 0
    %p151 = por %p149, %p150
    %s153 = sadd.s32 %s152, 1
    %p156 = scmp.eq.s32.totalorder %s13, 3
    %p157 = scmp.ne.s32.totalorder %s152, %s154
    %p158 = scmp.eq.s32.totalorder %s13, 0
    %p159 = por %p157, %p158
    %p160 = scmp.ne.s32.totalorder %s152, %s154
    %p161 = scmp.eq.s32.totalorder %s18, 3
    %p162 = por %p160, %p161
    %p163 = scmp.ne.s32.totalorder %s154, %s155
    %p164 = scmp.eq.s32.totalorder %s18, 0
    %p165 = por %p163, %p164
    %p166 = scmp.ne.s32.totalorder %s154, %s155
    %p167 = scmp.eq.s32.totalorder %s19, 3
    %p168 = por %p166, %p167
    %p170 = scmp.ne.s32.totalorder %s155, %s169
    %p171 = scmp.eq.s32.totalorder %s19, 0
    %p172 = por %p170, %p171
    %s173 = ssub.s32 %s13, %s20
    %p174 = scmp.eq.s32.totalorder %s173, 0
    %s176 = sadd.s32 %s175, 1
    %s177 = scalar_select %p174, %s175, %s176
    %p180 = pneg %p174
    %p181 = scmp.eq.s32.totalorder %s13, 3
    %p182 = por %p180, %p181
    %p183 = scmp.ne.s32.totalorder %s175, %s178
    %p184 = scmp.eq.s32.totalorder %s13, 0
    %p185 = por %p183, %p184
    %p186 = scmp.ne.s32.totalorder %s175, %s178
    %p187 = scmp.eq.s32.totalorder %s18, 3
    %p188 = por %p186, %p187
    %p189 = scmp.ne.s32.totalorder %s178, %s179
    %p190 = scmp.eq.s32.totalorder %s18, 0
    %p191 = por %p189, %p190
    %p192 = scmp.ne.s32.totalorder %s178, %s179
    %p193 = scmp.eq.s32.totalorder %s19, 3
    %p194 = por %p192, %p193
    %p196 = scmp.ne.s32.totalorder %s179, %s195
    %p197 = scmp.eq.s32.totalorder %s19, 0
    %p198 = por %p196, %p197
    %p199 = scmp.le.s32.totalorder 1, %s13
    %p200 = scmp.lt.s32.totalorder %s13, 5
    %p201 = pnand %p199, %p200
    %p202 = pneg %p201
    // Predicated region
    $region9: #{encode_image.9} parent=5 // pred_check
      _
    $region10: #{encode_image.9} parent=5 // pred_check_branch
      %204 = sbr.rel (%p201) target = $region12
    $region11: #{encode_image.9} parent=5 // pred_region
      %s205 = ssub.s32 %s13, 1
      // Predicated region
      $region13: #{encode_image.9} parent=11 // pred_check
        %p206 = pneg %p60
      $region14: #{encode_image.9} parent=11 // pred_check_branch
        %208 = sbr.rel (%p206) target = $region16
      $region15: #{encode_image.9} parent=11 // pred_region
        _
      $region16: #{encode_image.9} parent=11 // pred_fallthru
        _
      // Predicated region
      $region17: #{encode_image.9} parent=11 // pred_check
        %p209 = pneg %p81
      $region18: #{encode_image.9} parent=11 // pred_check_branch
        %211 = sbr.rel (%p209) target = $region20
      $region19: #{encode_image.9} parent=11 // pred_region
        _
      $region20: #{encode_image.9} parent=11 // pred_fallthru
        _
      // Predicated region
      $region21: #{encode_image.9} parent=11 // pred_check
        %p212 = pneg %p102
      $region22: #{encode_image.9} parent=11 // pred_check_branch
        %214 = sbr.rel (%p212) target = $region24
      $region23: #{encode_image.9} parent=11 // pred_region
        _
      $region24: #{encode_image.9} parent=11 // pred_fallthru
        _
      // Predicated region
      $region25: #{encode_image.9} parent=11 // pred_check
        %p215 = pneg %p123
      $region26: #{encode_image.9} parent=11 // pred_check_branch
        %217 = sbr.rel (%p215) target = $region28
      $region27: #{encode_image.9} parent=11 // pred_region
        _
      $region28: #{encode_image.9} parent=11 // pred_fallthru
        _
      // Predicated region
      $region29: #{encode_image.9} parent=11 // pred_check
        %p218 = pneg %p144
      $region30: #{encode_image.9} parent=11 // pred_check_branch
        %220 = sbr.rel (%p218) target = $region32
      $region31: #{encode_image.9} parent=11 // pred_region
        _
      $region32: #{encode_image.9} parent=11 // pred_fallthru
        _
      // Predicated region
      $region33: #{encode_image.9} parent=11 // pred_check
        %p221 = pneg %p165
      $region34: #{encode_image.9} parent=11 // pred_check_branch
        %223 = sbr.rel (%p221) target = $region36
      $region35: #{encode_image.9} parent=11 // pred_region
        _
      $region36: #{encode_image.9} parent=11 // pred_fallthru
        _
    $region12: #{encode_image.9} parent=5 // pred_fallthru
      _
    %p224 = scmp.lt.s32.totalorder %s13, 4
    // Predicated region
    $region37: #{encode_image.9} parent=5 // pred_check
      %p225 = pneg %p224
    $region38: #{encode_image.9} parent=5 // pred_check_branch
      %227 = sbr.rel (%p225) target = $region40
    $region39: #{encode_image.9} parent=5 // pred_region
      // Predicated region
      $region41: #{encode_image.9} parent=39 // pred_check
        %p228 = pneg %p33
      $region42: #{encode_image.9} parent=39 // pred_check_branch
        %230 = sbr.rel (%p228) target = $region44
      $region43: #{encode_image.9} parent=39 // pred_region
        %p231 = scmp.lt.s32.totalorder %s13, 3
        %s232 = scalar_select %p231, %s13, 3
        %s233 = smul.addr %s232, 8
        %s234 = scalar_lea.vmem %s0, %s233
      $region44: #{encode_image.9} parent=39 // pred_fallthru
        _
    $region40: #{encode_image.9} parent=5 // pred_fallthru
      _
    %p235 = scmp.le.s32.totalorder 1, %s13
    %p236 = scmp.lt.s32.totalorder %s13, 5
    %p237 = pnand %p235, %p236
    %p238 = pneg %p237
    // Predicated region
    $region45: #{encode_image.9} parent=5 // pred_check
      _
    $region46: #{encode_image.9} parent=5 // pred_check_branch
      %240 = sbr.rel (%p237) target = $region48
    $region47: #{encode_image.9} parent=5 // pred_region
      %s241 = ssub.s32 %s13, 1
      %p242 = scmp.lt.s32.totalorder %s18, 3
      %s243 = scalar_select %p242, %s18, 3
      %s244 = smul.addr %s243, 8
      %s245 = scalar_lea.vmem %s0, %s244
      %p246 = pneg %p39
      %p247 = pneg %p36
      %p248 = pneg %p60
      %p249 = pneg %p57
      %p250 = pneg %p81
      %p251 = pneg %p78
      %p252 = pneg %p102
      %p253 = pneg %p99
      %p254 = pneg %p123
      %p255 = pneg %p120
      %p256 = pneg %p144
      %p257 = pneg %p141
      %p258 = pneg %p165
      %p259 = pneg %p162
      %p260 = pneg %p191
      %p261 = pneg %p188
      %p262 = scmp.lt.s32.totalorder %s18, 3
      %s263 = scalar_select %p262, %s18, 3
      %s264 = smul.addr %s263, 8
      %s265 = scalar_lea.vmem %s7, %s264
      %p266 = scmp.lt.s32.totalorder %s18, 3
      %s267 = scalar_select %p266, %s18, 3
      %s268 = smul.addr %s267, 8
      %s269 = scalar_lea.vmem %s0, %s268
      %p270 = scmp.lt.s32.totalorder %s18, 3
      %s271 = scalar_select %p270, %s18, 3
      %s272 = smul.addr %s271, 8
      %s273 = scalar_lea.vmem %s7, %s272
      %v275 = vld [vmem:[%s269] sm:$0xff]
      %vm276 = vcmask 261120
      %v277 = vsel %vm276, %v275, 0.0
      %278 = vadd.xlane.f32.xlu0 %v277
      %v279 = vpop.xlane.xlu0 %278
      %v280 = vrcp.pop 32.0
      %v281 = vmul.f32 %v279, %v280
      %v282 = vsub.f32 %v275, %v281
      %v283 = vmul.f32 %v282, %v282
      %v284 = vsel %vm276, %v283, 0.0
      %285 = vadd.xlane.f32.xlu0 %v284
      %v286 = vpop.xlane.xlu0 %285
      %v287 = vmul.f32 %v286, %v280
      %v288 = vadd.f32 %v287, 1e-05
      %v289 = vrsqrt.pop %v288
      %v290 = vmul.f32 %v282, %v289
      %v291 = vld [vmem:[%s1] sm:$0x1]
      %v293 = vlaneseq
      %v294 = vshrl.u32 %v293, 7
      %v295 = vsub.s32 0, %v294
      %v296 = vrot.slane %v291, %v295
      %v298 = vmul.f32 %v290, %v296
      %v299 = vld [vmem:[%s2] sm:$0x1]
      %v301 = vlaneseq
      %v302 = vshrl.u32 %v301, 7
      %v303 = vsub.s32 0, %v302
      %v304 = vrot.slane %v299, %v303
      %v306 = vadd.f32 %v298, %v304
      %v307 = vpack.c.bf16 %v306, %v306
      %v308 = vld [vmem:[%s3] sm:$0xf]
      %v309 = vld [vmem:[%s3 + $0x4] sm:$0xf]
      %v310 = vld [vmem:[%s3 + $0x8] sm:$0xf]
      %v311 = vld [vmem:[%s3 + $0xc] sm:$0xf]
      %v312 = vld [vmem:[%s4] sm:$0x1]
      %v314 = vlaneseq
      %v315 = vshrl.u32 %v314, 7
      %v316 = vsub.s32 0, %v315
      %v317 = vrot.slane %v312, %v316
      %v323 = vunpack.c.l.b16 %v308
      %v324 = vunpack.c.l.b16 %v309
      %v325 = vunpack.c.l.b16 %v310
      %v326 = vunpack.c.l.b16 %v311
      %v327 = vpack.c.b16 %v324, %v323
      %v328 = vpack.c.b16 %v326, %v325
      %v332 = vsel %vm276, %v307, 0
      %334 = vmatprep.subr.bf16.mxu0 0
      %335 = vmatpush1.bf16.msra.mxu0 %v327
      %336 = vmatprep.subr.bf16.mxu0 0
      %337 = vmatpush1.bf16.msra.mxu0 %v328
      %338 = vmatprep.subr.bf16.mxu0 0
      %339 = vmatpush1.bf16.msra.mxu0 0
      %340 = vmatprep.subr.bf16.mxu0 0
      %341 = vmatpush1.bf16.msra.mxu0 0
      %342 = vmatprep.subr.bf16.mxu0 0
      %343 = vmatpush1.bf16.msra.mxu0 0
      %344 = vmatprep.subr.bf16.mxu0 0
      %345 = vmatpush1.bf16.msra.mxu0 0
      %346 = vmatprep.subr.bf16.mxu0 0
      %347 = vmatpush1.bf16.msra.mxu0 0
      %348 = vmatprep.subr.bf16.mxu0 0
      %349 = vmatpush1.bf16.msra.mxu0 0
      %350 = vmatprep.subr.bf16.mxu0 0
      %351 = vmatpush1.bf16.msra.mxu0 0
      %352 = vmatprep.subr.bf16.mxu0 0
      %353 = vmatpush1.bf16.msra.mxu0 0
      %354 = vmatprep.subr.bf16.mxu0 0
      %355 = vmatpush1.bf16.msra.mxu0 0
      %356 = vmatprep.subr.bf16.mxu0 0
      %357 = vmatpush1.bf16.msra.mxu0 0
      %358 = vmatprep.subr.bf16.mxu0 0
      %359 = vmatpush1.bf16.msra.mxu0 0
      %360 = vmatprep.subr.bf16.mxu0 0
      %361 = vmatpush1.bf16.msra.mxu0 0
      %362 = vmatprep.subr.bf16.mxu0 0
      %363 = vmatpush1.bf16.msra.mxu0 0
      %364 = vmatprep.subr.bf16.mxu0 0
      %365 = vmatpush1.bf16.msra.mxu0 0
      %366 = vmatprep.mubr.bf16.mxu0 0
      %367 = vmatmul.mubr.bf16.gmra.mrb[0].mxu0 %v332
      %v368 = vpop.f32.mrb[0].mxu0
      %v369 = vadd.f32 %v317, %v368
      %v370 = vpop.f32.mrb[0].mxu0
      %v371 = vpop.f32.mrb[0].mxu0
      %v372 = vpop.f32.mrb[0].mxu0
      %373 = vdwg.mxu0
      %v374 = vlaneseq
      %v375 = vand.u32 %v374, 127
      %vm376 = vcmp.lt.s32.totalorder %v375, 5
      %v377 = vsel %vm376, 0.0, -1e+30
      %v378 = vpack.c.bf16 %v369, %v369
      %380 = vrot.lane.b32.xlu0 %v378, 96
      %v381 = vpop.permute.xlu0 %380
      %vm382 = vcmask 64512
      %v384 = vsel %vm382, %v378, 0
      %v387 = vsel %vm382, %v381, 0
      %389 = vmatprep.subr.bf16.mxu0 0
      %390 = vmatpush1.bf16.xpose.msra.mxu0 %v387
      %391 = vmatprep.subr.bf16.mxu0 0
      %392 = vmatpush1.bf16.xpose.msra.mxu0 0
      %393 = vmatprep.subr.bf16.mxu0 0
      %394 = vmatpush1.bf16.xpose.msra.mxu0 0
      %395 = vmatprep.subr.bf16.mxu0 0
      %396 = vmatpush1.bf16.xpose.msra.mxu0 0
      %397 = vmatprep.subr.bf16.mxu0 0
      %398 = vmatpush1.bf16.xpose.msra.mxu0 0
      %399 = vmatprep.subr.bf16.mxu0 0
      %400 = vmatpush1.bf16.xpose.msra.mxu0 0
      %401 = vmatprep.subr.bf16.mxu0 0
      %402 = vmatpush1.bf16.xpose.msra.mxu0 0
      %403 = vmatprep.subr.bf16.mxu0 0
      %404 = vmatpush1.bf16.xpose.msra.mxu0 0
      %405 = vmatprep.subr.bf16.mxu0 0
      %406 = vmatpush1.bf16.xpose.msra.mxu0 0
      %407 = vmatprep.subr.bf16.mxu0 0
      %408 = vmatpush1.bf16.xpose.msra.mxu0 0
      %409 = vmatprep.subr.bf16.mxu0 0
      %410 = vmatpush1.bf16.xpose.msra.mxu0 0
      %411 = vmatprep.subr.bf16.mxu0 0
      %412 = vmatpush1.bf16.xpose.msra.mxu0 0
      %413 = vmatprep.subr.bf16.mxu0 0
      %414 = vmatpush1.bf16.xpose.msra.mxu0 0
      %415 = vmatprep.subr.bf16.mxu0 0
      %416 = vmatpush1.bf16.xpose.msra.mxu0 0
      %417 = vmatprep.subr.bf16.mxu0 0
      %418 = vmatpush1.bf16.xpose.msra.mxu0 0
      %419 = vmatprep.subr.bf16.mxu0 0
      %420 = vmatpush1.bf16.xpose.msra.mxu0 0
      %421 = vmatprep.mubr.bf16.mxu0 0
      %422 = vmatmul.mubr.bf16.gmra.mrb[0].mxu0 %v384
      %v423 = vpop.f32.mrb[0].mxu0
      %v424 = vadd.f32 0.0, %v423
      %v425 = vpop.f32.mrb[0].mxu0
      %v426 = vpop.f32.mrb[0].mxu0
      %v427 = vpop.f32.mrb[0].mxu0
      %428 = vdwg.mxu0
      %v429 = vmul.f32 %v424, 0.35355338
      %v430 = vadd.f32 %v429, %v377
      %v431 = vsel %vm382, %v430, -inf
      %432 = vmax.xlane.f32.xlu0 %v431
      %v433 = vpop.xlane.xlu0 %432
      %v434 = vsub.f32 %v430, %v433
      %v435 = vmul.f32 %v434, 1.442695
      %v436 = vpow.pop %v435
      %v437 = vsel %vm382, %v436, 0.0
      %438 = vadd.xlane.f32.xlu0 %v437
      %v439 = vpop.xlane.xlu0 %438
      %v440 = vrcp.pop %v439
      %v441 = vmul.f32 %v436, %v440
      %v442 = vpack.c.bf16 %v441, %v441
      %443 = vrot.lane.b32.xlu0 %v378, 64
      %v444 = vpop.permute.xlu0 %443
      %v446 = vsel %vm382, %v442, 0
      %vm448 = vcmask 1043456
      %v450 = vsel %vm448, %v444, 0
      %452 = vmatprep.subr.bf16.mxu0 0
      %453 = vmatpush1.bf16.msra.mxu0 %v450
      %454 = vmatprep.subr.bf16.mxu0 0
      %455 = vmatpush1.bf16.msra.mxu0 0
      %456 = vmatprep.subr.bf16.mxu0 0
      %457 = vmatpush1.bf16.msra.mxu0 0
      %458 = vmatprep.subr.bf16.mxu0 0
      %459 = vmatpush1.bf16.msra.mxu0 0
      %460 = vmatprep.subr.bf16.mxu0 0
      %461 = vmatpush1.bf16.msra.mxu0 0
      %462 = vmatprep.subr.bf16.mxu0 0
      %463 = vmatpush1.bf16.msra.mxu0 0
      %464 = vmatprep.subr.bf16.mxu0 0
      %465 = vmatpush1.bf16.msra.mxu0 0
      %466 = vmatprep.subr.bf16.mxu0 0
      %467 = vmatpush1.bf16.msra.mxu0 0
      %468 = vmatprep.subr.bf16.mxu0 0
      %469 = vmatpush1.bf16.msra.mxu0 0
      %470 = vmatprep.subr.bf16.mxu0 0
      %471 = vmatpush1.bf16.msra.mxu0 0
      %472 = vmatprep.subr.bf16.mxu0 0
      %473 = vmatpush1.bf16.msra.mxu0 0
      %474 = vmatprep.subr.bf16.mxu0 0
      %475 = vmatpush1.bf16.msra.mxu0 0
      %476 = vmatprep.subr.bf16.mxu0 0
      %477 = vmatpush1.bf16.msra.mxu0 0
      %478 = vmatprep.subr.bf16.mxu0 0
      %479 = vmatpush1.bf16.msra.mxu0 0
      %480 = vmatprep.subr.bf16.mxu0 0
      %481 = vmatpush1.bf16.msra.mxu0 0
      %482 = vmatprep.subr.bf16.mxu0 0
      %483 = vmatpush1.bf16.msra.mxu0 0
      %484 = vmatprep.mubr.bf16.mxu0 0
      %485 = vmatmul.mubr.bf16.gmra.mrb[0].mxu0 %v446
      %v486 = vpop.f32.mrb[0].mxu0
      %v487 = vadd.f32 0.0, %v486
      %v488 = vpop.f32.mrb[0].mxu0
      %v489 = vpop.f32.mrb[0].mxu0
      %v490 = vpop.f32.mrb[0].mxu0
      %491 = vdwg.mxu0
      %492 = vrot.lane.b32.xlu0 %v378, 120
      %v493 = vpop.permute.xlu0 %492
      %494 = vrot.lane.b32.xlu0 %v378, 88
      %v495 = vpop.permute.xlu0 %494
      %v497 = vsel %vm382, %v493, 0
      %v500 = vsel %vm382, %v495, 0
      %502 = vmatprep.subr.bf16.mxu0 0
      %503 = vmatpush1.bf16.xpose.msra.mxu0 %v500
      %504 = vmatprep.subr.bf16.mxu0 0
      %505 = vmatpush1.bf16.xpose.msra.mxu0 0
      %506 = vmatprep.subr.bf16.mxu0 0
      %507 = vmatpush1.bf16.xpose.msra.mxu0 0
      %508 = vmatprep.subr.bf16.mxu0 0
      %509 = vmatpush1.bf16.xpose.msra.mxu0 0
      %510 = vmatprep.subr.bf16.mxu0 0
      %511 = vmatpush1.bf16.xpose.msra.mxu0 0
      %512 = vmatprep.subr.bf16.mxu0 0
      %513 = vmatpush1.bf16.xpose.msra.mxu0 0
      %514 = vmatprep.subr.bf16.mxu0 0
      %515 = vmatpush1.bf16.xpose.msra.mxu0 0
      %516 = vmatprep.subr.bf16.mxu0 0
      %517 = vmatpush1.bf16.xpose.msra.mxu0 0
      %518 = vmatprep.subr.bf16.mxu0 0
      %519 = vmatpush1.bf16.xpose.msra.mxu0 0
      %520 = vmatprep.subr.bf16.mxu0 0
      %521 = vmatpush1.bf16.xpose.msra.mxu0 0
      %522 = vmatprep.subr.bf16.mxu0 0
      %523 = vmatpush1.bf16.xpose.msra.mxu0 0
      %524 = vmatprep.subr.bf16.mxu0 0
      %525 = vmatpush1.bf16.xpose.msra.mxu0 0
      %526 = vmatprep.subr.bf16.mxu0 0
      %527 = vmatpush1.bf16.xpose.msra.mxu0 0
      %528 = vmatprep.subr.bf16.mxu0 0
      %529 = vmatpush1.bf16.xpose.msra.mxu0 0
      %530 = vmatprep.subr.bf16.mxu0 0
      %531 = vmatpush1.bf16.xpose.msra.mxu0 0
      %532 = vmatprep.subr.bf16.mxu0 0
      %533 = vmatpush1.bf16.xpose.msra.mxu0 0
      %534 = vmatprep.mubr.bf16.mxu0 0
      %535 = vmatmul.mubr.bf16.gmra.mrb[0].mxu0 %v497
      %v536 = vpop.f32.mrb[0].mxu0
      %v537 = vadd.f32 0.0, %v536
      %v538 = vpop.f32.mrb[0].mxu0
      %v539 = vpop.f32.mrb[0].mxu0
      %v540 = vpop.f32.mrb[0].mxu0
      %541 = vdwg.mxu0
      %v542 = vmul.f32 %v537, 0.35355338
      %v543 = vadd.f32 %v542, %v377
      %v544 = vsel %vm382, %v543, -inf
      %545 = vmax.xlane.f32.xlu0 %v544
      %v546 = vpop.xlane.xlu0 %545
      %v547 = vsub.f32 %v543, %v546
      %v548 = vmul.f32 %v547, 1.442695
      %v549 = vpow.pop %v548
      %v550 = vsel %vm382, %v549, 0.0
      %551 = vadd.xlane.f32.xlu0 %v550
      %v552 = vpop.xlane.xlu0 %551
      %v553 = vrcp.pop %v552
      %v554 = vmul.f32 %v549, %v553
      %v555 = vpack.c.bf16 %v554, %v554
      %556 = vrot.lane.b32.xlu0 %v378, 56
      %v557 = vpop.permute.xlu0 %556
      %v559 = vsel %vm382, %v555, 0
      %v562 = vsel %vm448, %v557, 0
      %564 = vmatprep.subr.bf16.mxu0 0
      %565 = vmatpush1.bf16.msra.mxu0 %v562
      %566 = vmatprep.subr.bf16.mxu0 0
      %567 = vmatpush1.bf16.msra.mxu0 0
      %568 = vmatprep.subr.bf16.mxu0 0
      %569 = vmatpush1.bf16.msra.mxu0 0
      %570 = vmatprep.subr.bf16.mxu0 0
      %571 = vmatpush1.bf16.msra.mxu0 0
      %572 = vmatprep.subr.bf16.mxu0 0
      %573 = vmatpush1.bf16.msra.mxu0 0
      %574 = vmatprep.subr.bf16.mxu0 0
      %575 = vmatpush1.bf16.msra.mxu0 0
      %576 = vmatprep.subr.bf16.mxu0 0
      %577 = vmatpush1.bf16.msra.mxu0 0
      %578 = vmatprep.subr.bf16.mxu0 0
      %579 = vmatpush1.bf16.msra.mxu0 0
      %580 = vmatprep.subr.bf16.mxu0 0
      %581 = vmatpush1.bf16.msra.mxu0 0
      %582 = vmatprep.subr.bf16.mxu0 0
      %583 = vmatpush1.bf16.msra.mxu0 0
      %584 = vmatprep.subr.bf16.mxu0 0
      %585 = vmatpush1.bf16.msra.mxu0 0
      %586 = vmatprep.subr.bf16.mxu0 0
      %587 = vmatpush1.bf16.msra.mxu0 0
      %588 = vmatprep.subr.bf16.mxu0 0
      %589 = vmatpush1.bf16.msra.mxu0 0
      %590 = vmatprep.subr.bf16.mxu0 0
      %591 = vmatpush1.bf16.msra.mxu0 0
      %592 = vmatprep.subr.bf16.mxu0 0
      %593 = vmatpush1.bf16.msra.mxu0 0
      %594 = vmatprep.subr.bf16.mxu0 0
      %595 = vmatpush1.bf16.msra.mxu0 0
      %596 = vmatprep.mubr.bf16.mxu0 0
      %597 = vmatmul.mubr.bf16.gmra.mrb[0].mxu0 %v559
      %v598 = vpop.f32.mrb[0].mxu0
      %v599 = vadd.f32 0.0, %v598
      %v600 = vpop.f32.mrb[0].mxu0
      %v601 = vpop.f32.mrb[0].mxu0
      %v602 = vpop.f32.mrb[0].mxu0
      %603 = vdwg.mxu0
      %604 = vrot.lane.b32.xlu0 %v378, 112
      %v605 = vpop.permute.xlu0 %604
      %606 = vrot.lane.b32.xlu0 %v378, 80
      %v607 = vpop.permute.xlu0 %606
      %v609 = vsel %vm382, %v605, 0
      %v612 = vsel %vm382, %v607, 0
      %614 = vmatprep.subr.bf16.mxu0 0
      %615 = vmatpush1.bf16.xpose.msra.mxu0 %v612
      %616 = vmatprep.subr.bf16.mxu0 0
      %617 = vmatpush1.bf16.xpose.msra.mxu0 0
      %618 = vmatprep.subr.bf16.mxu0 0
      %619 = vmatpush1.bf16.xpose.msra.mxu0 0
      %620 = vmatprep.subr.bf16.mxu0 0
      %621 = vmatpush1.bf16.xpose.msra.mxu0 0
      %622 = vmatprep.subr.bf16.mxu0 0
      %623 = vmatpush1.bf16.xpose.msra.mxu0 0
      %624 = vmatprep.subr.bf16.mxu0 0
      %625 = vmatpush1.bf16.xpose.msra.mxu0 0
      %626 = vmatprep.subr.bf16.mxu0 0
      %627 = vmatpush1.bf16.xpose.msra.mxu0 0
      %628 = vmatprep.subr.bf16.mxu0 0
      %629 = vmatpush1.bf16.xpose.msra.mxu0 0
      %630 = vmatprep.subr.bf16.mxu0 0
      %631 = vmatpush1.bf16.xpose.msra.mxu0 0
      %632 = vmatprep.subr.bf16.mxu0 0
      %633 = vmatpush1.bf16.xpose.msra.mxu0 0
      %634 = vmatprep.subr.bf16.mxu0 0
      %635 = vmatpush1.bf16.xpose.msra.mxu0 0
      %636 = vmatprep.subr.bf16.mxu0 0
      %637 = vmatpush1.bf16.xpose.msra.mxu0 0
      %638 = vmatprep.subr.bf16.mxu0 0
      %639 = vmatpush1.bf16.xpose.msra.mxu0 0
      %640 = vmatprep.subr.bf16.mxu0 0
      %641 = vmatpush1.bf16.xpose.msra.mxu0 0
      %642 = vmatprep.subr.bf16.mxu0 0
      %643 = vmatpush1.bf16.xpose.msra.mxu0 0
      %644 = vmatprep.subr.bf16.mxu0 0
      %645 = vmatpush1.bf16.xpose.msra.mxu0 0
      %646 = vmatprep.mubr.bf16.mxu0 0
      %647 = vmatmul.mubr.bf16.gmra.mrb[0].mxu0 %v609
      %v648 = vpop.f32.mrb[0].mxu0
      %v649 = vadd.f32 0.0, %v648
      %v650 = vpop.f32.mrb[0].mxu0
      %v651 = vpop.f32.mrb[0].mxu0
      %v652 = vpop.f32.mrb[0].mxu0
      %653 = vdwg.mxu0
      %v654 = vmul.f32 %v649, 0.35355338
      %v655 = vadd.f32 %v654, %v377
      %v656 = vsel %vm382, %v655, -inf
      %657 = vmax.xlane.f32.xlu0 %v656
      %v658 = vpop.xlane.xlu0 %657
      %v659 = vsub.f32 %v655, %v658
      %v660 = vmul.f32 %v659, 1.442695
      %v661 = vpow.pop %v660
      %v662 = vsel %vm382, %v661, 0.0
      %663 = vadd.xlane.f32.xlu0 %v662
      %v664 = vpop.xlane.xlu0 %663
      %v665 = vrcp.pop %v664
      %v666 = vmul.f32 %v661, %v665
      %v667 = vpack.c.bf16 %v666, %v666
      %668 = vrot.lane.b32.xlu0 %v378, 48
      %v669 = vpop.permute.xlu0 %668
      %v671 = vsel %vm382, %v667, 0
      %v674 = vsel %vm448, %v669, 0
      %676 = vmatprep.subr.bf16.mxu0 0
      %677 = vmatpush1.bf16.msra.mxu0 %v674
      %678 = vmatprep.subr.bf16.mxu0 0
      %679 = vmatpush1.bf16.msra.mxu0 0
      %680 = vmatprep.subr.bf16.mxu0 0
      %681 = vmatpush1.bf16.msra.mxu0 0
      %682 = vmatprep.subr.bf16.mxu0 0
      %683 = vmatpush1.bf16.msra.mxu0 0
      %684 = vmatprep.subr.bf16.mxu0 0
      %685 = vmatpush1.bf16.msra.mxu0 0
      %686 = vmatprep.subr.bf16.mxu0 0
      %687 = vmatpush1.bf16.msra.mxu0 0
      %688 = vmatprep.subr.bf16.mxu0 0
      %689 = vmatpush1.bf16.msra.mxu0 0
      %690 = vmatprep.subr.bf16.mxu0 0
      %691 = vmatpush1.bf16.msra.mxu0 0
      %692 = vmatprep.subr.bf16.mxu0 0
      %693 = vmatpush1.bf16.msra.mxu0 0
      %694 = vmatprep.subr.bf16.mxu0 0
      %695 = vmatpush1.bf16.msra.mxu0 0
      %696 = vmatprep.subr.bf16.mxu0 0
      %697 = vmatpush1.bf16.msra.mxu0 0
      %698 = vmatprep.subr.bf16.mxu0 0
      %699 = vmatpush1.bf16.msra.mxu0 0
      %700 = vmatprep.subr.bf16.mxu0 0
      %701 = vmatpush1.bf16.msra.mxu0 0
      %702 = vmatprep.subr.bf16.mxu0 0
      %703 = vmatpush1.bf16.msra.mxu0 0
      %704 = vmatprep.subr.bf16.mxu0 0
      %705 = vmatpush1.bf16.msra.mxu0 0
      %706 = vmatprep.subr.bf16.mxu0 0
      %707 = vmatpush1.bf16.msra.mxu0 0
      %708 = vmatprep.mubr.bf16.mxu0 0
      %709 = vmatmul.mubr.bf16.gmra.mrb[0].mxu0 %v671
      %v710 = vpop.f32.mrb[0].mxu0
      %v711 = vadd.f32 0.0, %v710
      %v712 = vpop.f32.mrb[0].mxu0
      %v713 = vpop.f32.mrb[0].mxu0
      %v714 = vpop.f32.mrb[0].mxu0
      %715 = vdwg.mxu0
      %716 = vrot.lane.b32.xlu0 %v378, 104
      %v717 = vpop.permute.xlu0 %716
      %718 = vrot.lane.b32.xlu0 %v378, 72
      %v719 = vpop.permute.xlu0 %718
      %v721 = vsel %vm382, %v717, 0
      %v724 = vsel %vm382, %v719, 0
      %726 = vmatprep.subr.bf16.mxu0 0
      %727 = vmatpush1.bf16.xpose.msra.mxu0 %v724
      %728 = vmatprep.subr.bf16.mxu0 0
      %729 = vmatpush1.bf16.xpose.msra.mxu0 0
      %730 = vmatprep.subr.bf16.mxu0 0
      %731 = vmatpush1.bf16.xpose.msra.mxu0 0
      %732 = vmatprep.subr.bf16.mxu0 0
      %733 = vmatpush1.bf16.xpose.msra.mxu0 0
      %734 = vmatprep.subr.bf16.mxu0 0
      %735 = vmatpush1.bf16.xpose.msra.mxu0 0
      %736 = vmatprep.subr.bf16.mxu0 0
      %737 = vmatpush1.bf16.xpose.msra.mxu0 0
      %738 = vmatprep.subr.bf16.mxu0 0
      %739 = vmatpush1.bf16.xpose.msra.mxu0 0
      %740 = vmatprep.subr.bf16.mxu0 0
      %741 = vmatpush1.bf16.xpose.msra.mxu0 0
      %742 = vmatprep.subr.bf16.mxu0 0
      %743 = vmatpush1.bf16.xpose.msra.mxu0 0
      %744 = vmatprep.subr.bf16.mxu0 0
      %745 = vmatpush1.bf16.xpose.msra.mxu0 0
      %746 = vmatprep.subr.bf16.mxu0 0
      %747 = vmatpush1.bf16.xpose.msra.mxu0 0
      %748 = vmatprep.subr.bf16.mxu0 0
      %749 = vmatpush1.bf16.xpose.msra.mxu0 0
      %750 = vmatprep.subr.bf16.mxu0 0
      %751 = vmatpush1.bf16.xpose.msra.mxu0 0
      %752 = vmatprep.subr.bf16.mxu0 0
      %753 = vmatpush1.bf16.xpose.msra.mxu0 0
      %754 = vmatprep.subr.bf16.mxu0 0
      %755 = vmatpush1.bf16.xpose.msra.mxu0 0
      %756 = vmatprep.subr.bf16.mxu0 0
      %757 = vmatpush1.bf16.xpose.msra.mxu0 0
      %758 = vmatprep.mubr.bf16.mxu0 0
      %759 = vmatmul.mubr.bf16.gmra.mrb[0].mxu0 %v721
      %v760 = vpop.f32.mrb[0].mxu0
      %v761 = vadd.f32 0.0, %v760
      %v762 = vpop.f32.mrb[0].mxu0
      %v763 = vpop.f32.mrb[0].mxu0
      %v764 = vpop.f32.mrb[0].mxu0
      %765 = vdwg.mxu0
      %v766 = vmul.f32 %v761, 0.35355338
      %v767 = vadd.f32 %v766, %v377
      %v768 = vsel %vm382, %v767, -inf
      %769 = vmax.xlane.f32.xlu0 %v768
      %v770 = vpop.xlane.xlu0 %769
      %v771 = vsub.f32 %v767, %v770
      %v772 = vmul.f32 %v771, 1.442695
      %v773 = vpow.pop %v772
      %v774 = vsel %vm382, %v773, 0.0
      %775 = vadd.xlane.f32.xlu0 %v774
      %v776 = vpop.xlane.xlu0 %775
      %v777 = vrcp.pop %v776
      %v778 = vmul.f32 %v773, %v777
      %v779 = vpack.c.bf16 %v778, %v778
      %780 = vrot.lane.b32.xlu0 %v378, 40
      %v781 = vpop.permute.xlu0 %780
      %v783 = vsel %vm382, %v779, 0
      %v786 = vsel %vm448, %v781, 0
      %788 = vmatprep.subr.bf16.mxu0 0
      %789 = vmatpush1.bf16.msra.mxu0 %v786
      %790 = vmatprep.subr.bf16.mxu0 0
      %791 = vmatpush1.bf16.msra.mxu0 0
      %792 = vmatprep.subr.bf16.mxu0 0
      %793 = vmatpush1.bf16.msra.mxu0 0
      %794 = vmatprep.subr.bf16.mxu0 0
      %795 = vmatpush1.bf16.msra.mxu0 0
      %796 = vmatprep.subr.bf16.mxu0 0
      %797 = vmatpush1.bf16.msra.mxu0 0
      %798 = vmatprep.subr.bf16.mxu0 0
      %799 = vmatpush1.bf16.msra.mxu0 0
      %800 = vmatprep.subr.bf16.mxu0 0
      %801 = vmatpush1.bf16.msra.mxu0 0
      %802 = vmatprep.subr.bf16.mxu0 0
      %803 = vmatpush1.bf16.msra.mxu0 0
      %804 = vmatprep.subr.bf16.mxu0 0
      %805 = vmatpush1.bf16.msra.mxu0 0
      %806 = vmatprep.subr.bf16.mxu0 0
      %807 = vmatpush1.bf16.msra.mxu0 0
      %808 = vmatprep.subr.bf16.mxu0 0
      %809 = vmatpush1.bf16.msra.mxu0 0
      %810 = vmatprep.subr.bf16.mxu0 0
      %811 = vmatpush1.bf16.msra.mxu0 0
      %812 = vmatprep.subr.bf16.mxu0 0
      %813 = vmatpush1.bf16.msra.mxu0 0
      %814 = vmatprep.subr.bf16.mxu0 0
      %815 = vmatpush1.bf16.msra.mxu0 0
      %816 = vmatprep.subr.bf16.mxu0 0
      %817 = vmatpush1.bf16.msra.mxu0 0
      %818 = vmatprep.subr.bf16.mxu0 0
      %819 = vmatpush1.bf16.msra.mxu0 0
      %820 = vmatprep.mubr.bf16.mxu0 0
      %821 = vmatmul.mubr.bf16.gmra.mrb[0].mxu0 %v783
      %v822 = vpop.f32.mrb[0].mxu0
      %v823 = vadd.f32 0.0, %v822
      %v824 = vpop.f32.mrb[0].mxu0
      %v825 = vpop.f32.mrb[0].mxu0
      %v826 = vpop.f32.mrb[0].mxu0
      %827 = vdwg.mxu0
      %829 = vrot.lane.b32.xlu0 %v599, 8
      %v830 = vpop.permute.xlu0 %829
      %833 = vrot.lane.b32.xlu0 %v711, 16
      %v834 = vpop.permute.xlu0 %833
      %837 = vrot.lane.b32.xlu0 %v823, 24
      %v838 = vpop.permute.xlu0 %837
      %v840 = vsel %vm382, %v487, %v830
      %vm841 = vcmask 130048
      %v842 = vsel %vm841, %v840, %v834
      %vm843 = vcmask 195584
      %v844 = vsel %vm843, %v842, %v838
      %v845 = vpack.c.bf16 %v844, %v844
      %v846 = vld [vmem:[%s5] sm:$0xf]
      %v847 = vld [vmem:[%s5 + $0x4] sm:$0xf]
      %v848 = vld [vmem:[%s5 + $0x8] sm:$0xf]
      %v849 = vld [vmem:[%s5 + $0xc] sm:$0xf]
      %v850 = vld [vmem:[%s6] sm:$0x1]
      %v852 = vlaneseq
      %v853 = vshrl.u32 %v852, 7
      %v854 = vsub.s32 0, %v853
      %v855 = vrot.slane %v850, %v854
      %v861 = vunpack.c.l.b16 %v846
      %v862 = vunpack.c.l.b16 %v847
      %v863 = vunpack.c.l.b16 %v848
      %v864 = vunpack.c.l.b16 %v849
      %v865 = vpack.c.b16 %v862, %v861
      %v866 = vpack.c.b16 %v864, %v863
      %v870 = vsel %vm276, %v845, 0
      %872 = vmatprep.subr.bf16.mxu0 0
      %873 = vmatpush1.bf16.msra.mxu0 %v865
      %874 = vmatprep.subr.bf16.mxu0 0
      %875 = vmatpush1.bf16.msra.mxu0 %v866
      %876 = vmatprep.subr.bf16.mxu0 0
      %877 = vmatpush1.bf16.msra.mxu0 0
      %878 = vmatprep.subr.bf16.mxu0 0
      %879 = vmatpush1.bf16.msra.mxu0 0
      %880 = vmatprep.subr.bf16.mxu0 0
      %881 = vmatpush1.bf16.msra.mxu0 0
      %882 = vmatprep.subr.bf16.mxu0 0
      %883 = vmatpush1.bf16.msra.mxu0 0
      %884 = vmatprep.subr.bf16.mxu0 0
      %885 = vmatpush1.bf16.msra.mxu0 0
      %886 = vmatprep.subr.bf16.mxu0 0
      %887 = vmatpush1.bf16.msra.mxu0 0
      %888 = vmatprep.subr.bf16.mxu0 0
      %889 = vmatpush1.bf16.msra.mxu0 0
      %890 = vmatprep.subr.bf16.mxu0 0
      %891 = vmatpush1.bf16.msra.mxu0 0
      %892 = vmatprep.subr.bf16.mxu0 0
      %893 = vmatpush1.bf16.msra.mxu0 0
      %894 = vmatprep.subr.bf16.mxu0 0
      %895 = vmatpush1.bf16.msra.mxu0 0
      %896 = vmatprep.subr.bf16.mxu0 0
      %897 = vmatpush1.bf16.msra.mxu0 0
      %898 = vmatprep.subr.bf16.mxu0 0
      %899 = vmatpush1.bf16.msra.mxu0 0
      %900 = vmatprep.subr.bf16.mxu0 0
      %901 = vmatpush1.bf16.msra.mxu0 0
      %902 = vmatprep.subr.bf16.mxu0 0
      %903 = vmatpush1.bf16.msra.mxu0 0
      %904 = vmatprep.mubr.bf16.mxu0 0
      %905 = vmatmul.mubr.bf16.gmra.mrb[0].mxu0 %v870
      %v906 = vpop.f32.mrb[0].mxu0
      %v907 = vadd.f32 %v855, %v906
      %v908 = vpop.f32.mrb[0].mxu0
      %v909 = vpop.f32.mrb[0].mxu0
      %v910 = vpop.f32.mrb[0].mxu0
      %911 = vdwg.mxu0
      %v912 = vadd.f32 %v275, %v907
      %913 = vst.msk [vmem:[%s273] sm:$0xff] %vm276, %v912
      %p914 = scmp.lt.s32.totalorder %s18, 3
      %s915 = scalar_select %p914, %s18, 3
      %s916 = smul.addr %s915, 8
      %s917 = scalar_lea.vmem %s7, %s916
      // Predicated region
      $region49: #{encode_image.9} parent=47 // pred_check
        %p918 = pneg %p188
      $region50: #{encode_image.9} parent=47 // pred_check_branch
        %920 = sbr.rel (%p918) target = $region52
      $region51: #{encode_image.9} parent=47 // pred_region
        _
      $region52: #{encode_image.9} parent=47 // pred_fallthru
        _
    $region48: #{encode_image.9} parent=5 // pred_fallthru
      _
    %p921 = scmp.le.s32.totalorder 2, %s13
    // Predicated region
    $region53: #{encode_image.9} parent=5 // pred_check
      %p922 = pneg %p921
    $region54: #{encode_image.9} parent=5 // pred_check_branch
      %924 = sbr.rel (%p922) target = $region56
    $region55: #{encode_image.9} parent=5 // pred_region
      %s925 = ssub.s32 %s13, 2
      // Predicated region
      $region57: #{encode_image.9} parent=55 // pred_check
        %p926 = pneg %p194
      $region58: #{encode_image.9} parent=55 // pred_check_branch
        %928 = sbr.rel (%p926) target = $region60
      $region59: #{encode_image.9} parent=55 // pred_region
        %p929 = scmp.lt.s32.totalorder %s19, 3
        %s930 = scalar_select %p929, %s19, 3
        %s931 = smul.addr %s930, 8
        %s932 = scalar_lea.vmem %s7, %s931
      $region60: #{encode_image.9} parent=55 // pred_fallthru
        _
    $region56: #{encode_image.9} parent=5 // pred_fallthru
      _
  $region6: #{encode_image.9} parent=0 // loop_footer
    %s17 = sadd.s32 1, %s13
  $region7: #{encode_image.9} parent=0 // loop_footer_branch
    %12 = sbr.rel target = $region3
  $region8: #{encode_image.9} parent=0 // loop_exit
    _

// kernel: encode_image.10
$region0: #{encode_image.10}
  #allocation0 [shape = 'u32[]', space=smem, size = 0x4, offset = 0x4, fixed_abs, tag = 'smem constant byte address 0x4 - core index']
  #allocation1 [shape = 'u32[144,128]{1,0:T(1,128)}', space=vmem, size = 0x12000, scoped, tag = 'internal scratch']
  %s0 = inlined_call_operand.vmem [shape: f32[32,32], index: 0, kind: input, shape index: {}]
  %s1 = inlined_call_operand.vmem [shape: f32[1,32], index: 1, kind: input, shape index: {}]
  %s2 = inlined_call_operand.vmem [shape: f32[1,32], index: 2, kind: input, shape index: {}]
  %s3 = inlined_call_operand.vmem [shape: bf16[32,128], index: 3, kind: input, shape index: {}]
  %s4 = inlined_call_operand.vmem [shape: f32[1,128], index: 4, kind: input, shape index: {}]
  %s5 = inlined_call_operand.vmem [shape: bf16[128,32], index: 5, kind: input, shape index: {}]
  %s6 = inlined_call_operand.vmem [shape: f32[1,32], index: 6, kind: input, shape index: {}]
  %s7 = inlined_call_operand.vmem [shape: f32[32,32], index: 7, kind: output, shape index: {}]
  %s8 = sld [smem:[#allocation0]]
  $region38: #{encode_image.10} parent=0
    _
  %s10 = ssub.s32 1, %s8
  %s11 = scalar_select 0, %s10, %s8
  // Predicated region
  $region2: #{encode_image.10} parent=0 // pred_check
    _
  $region3: #{encode_image.10} parent=0 // pred_check_branch
    %13 = sbr.rel (0) target = $region5
  $region4: #{encode_image.10} parent=0 // pred_region
    _
  $region5: #{encode_image.10} parent=0 // pred_fallthru
    _
  // Predicated region
  $region6: #{encode_image.10} parent=0 // pred_check
    _
  $region7: #{encode_image.10} parent=0 // pred_check_branch
    %15 = sbr.rel (0) target = $region9
  $region8: #{encode_image.10} parent=0 // pred_region
    _
  $region9: #{encode_image.10} parent=0 // pred_fallthru
    _
  // Predicated region
  $region10: #{encode_image.10} parent=0 // pred_check
    _
  $region11: #{encode_image.10} parent=0 // pred_check_branch
    %17 = sbr.rel (0) target = $region13
  $region12: #{encode_image.10} parent=0 // pred_region
    _
  $region13: #{encode_image.10} parent=0 // pred_fallthru
    _
  // Predicated region
  $region14: #{encode_image.10} parent=0 // pred_check
    _
  $region15: #{encode_image.10} parent=0 // pred_check_branch
    %19 = sbr.rel (0) target = $region17
  $region16: #{encode_image.10} parent=0 // pred_region
    _
  $region17: #{encode_image.10} parent=0 // pred_fallthru
    _
  // Predicated region
  $region18: #{encode_image.10} parent=0 // pred_check
    _
  $region19: #{encode_image.10} parent=0 // pred_check_branch
    %21 = sbr.rel (0) target = $region21
  $region20: #{encode_image.10} parent=0 // pred_region
    _
  $region21: #{encode_image.10} parent=0 // pred_fallthru
    _
  // Predicated region
  $region22: #{encode_image.10} parent=0 // pred_check
    _
  $region23: #{encode_image.10} parent=0 // pred_check_branch
    %23 = sbr.rel (0) target = $region25
  $region24: #{encode_image.10} parent=0 // pred_region
    _
  $region25: #{encode_image.10} parent=0 // pred_fallthru
    _
  // Predicated region
  $region26: #{encode_image.10} parent=0 // pred_check
    _
  $region27: #{encode_image.10} parent=0 // pred_check_branch
    %25 = sbr.rel (0) target = $region29
  $region28: #{encode_image.10} parent=0 // pred_region
    _
  $region29: #{encode_image.10} parent=0 // pred_fallthru
    _
  %v27 = vld [vmem:[%s0] sm:$0xff]
  %v28 = vld [vmem:[%s0 + $0x8] sm:$0xff]
  %v29 = vld [vmem:[%s0 + $0x10] sm:$0xff]
  %v30 = vld [vmem:[%s0 + $0x18] sm:$0xff]
  %vm31 = vcmask 261120
  %v32 = vsel %vm31, %v27, 0.0
  %33 = vadd.xlane.f32.xlu0 %v32
  %v34 = vpop.xlane.xlu0 %33
  %v35 = vsel %vm31, %v28, 0.0
  %36 = vadd.xlane.f32.xlu0 %v35
  %v37 = vpop.xlane.xlu0 %36
  %v38 = vsel %vm31, %v29, 0.0
  %39 = vadd.xlane.f32.xlu0 %v38
  %v40 = vpop.xlane.xlu0 %39
  %v41 = vsel %vm31, %v30, 0.0
  %42 = vadd.xlane.f32.xlu0 %v41
  %v43 = vpop.xlane.xlu0 %42
  %v44 = vrcp.pop 32.0
  %v45 = vmul.f32 %v34, %v44
  %v46 = vmul.f32 %v37, %v44
  %v47 = vmul.f32 %v40, %v44
  %v48 = vmul.f32 %v43, %v44
  %v49 = vsub.f32 %v27, %v45
  %v50 = vsub.f32 %v28, %v46
  %v51 = vsub.f32 %v29, %v47
  %v52 = vsub.f32 %v30, %v48
  %v53 = vmul.f32 %v49, %v49
  %v54 = vmul.f32 %v50, %v50
  %v55 = vmul.f32 %v51, %v51
  %v56 = vmul.f32 %v52, %v52
  %v57 = vsel %vm31, %v53, 0.0
  %58 = vadd.xlane.f32.xlu0 %v57
  %v59 = vpop.xlane.xlu0 %58
  %v60 = vsel %vm31, %v54, 0.0
  %61 = vadd.xlane.f32.xlu0 %v60
  %v62 = vpop.xlane.xlu0 %61
  %v63 = vsel %vm31, %v55, 0.0
  %64 = vadd.xlane.f32.xlu0 %v63
  %v65 = vpop.xlane.xlu0 %64
  %v66 = vsel %vm31, %v56, 0.0
  %67 = vadd.xlane.f32.xlu0 %v66
  %v68 = vpop.xlane.xlu0 %67
  %v69 = vmul.f32 %v59, %v44
  %v70 = vmul.f32 %v62, %v44
  %v71 = vmul.f32 %v65, %v44
  %v72 = vmul.f32 %v68, %v44
  %v73 = vadd.f32 %v69, 1e-05
  %v74 = vadd.f32 %v70, 1e-05
  %v75 = vadd.f32 %v71, 1e-05
  %v76 = vadd.f32 %v72, 1e-05
  %v77 = vrsqrt.pop %v73
  %v78 = vrsqrt.pop %v74
  %v79 = vrsqrt.pop %v75
  %v80 = vrsqrt.pop %v76
  %v81 = vmul.f32 %v49, %v77
  %v82 = vmul.f32 %v50, %v78
  %v83 = vmul.f32 %v51, %v79
  %v84 = vmul.f32 %v52, %v80
  %v85 = vld [vmem:[%s1] sm:$0x1]
  %v87 = vlaneseq
  %v88 = vshrl.u32 %v87, 7
  %v89 = vsub.s32 0, %v88
  %v90 = vrot.slane %v85, %v89
  %v92 = vmul.f32 %v81, %v90
  %v93 = vmul.f32 %v82, %v90
  %v94 = vmul.f32 %v83, %v90
  %v95 = vmul.f32 %v84, %v90
  %v96 = vld [vmem:[%s2] sm:$0x1]
  %v98 = vlaneseq
  %v99 = vshrl.u32 %v98, 7
  %v100 = vsub.s32 0, %v99
  %v101 = vrot.slane %v96, %v100
  %v103 = vadd.f32 %v92, %v101
  %v104 = vadd.f32 %v93, %v101
  %v105 = vadd.f32 %v94, %v101
  %v106 = vadd.f32 %v95, %v101
  %v107 = vpack.c.bf16 %v104, %v103
  %v108 = vpack.c.bf16 %v106, %v105
  %v109 = vld [vmem:[%s3] sm:$0xf]
  %v110 = vld [vmem:[%s3 + $0x4] sm:$0xf]
  %v111 = vld [vmem:[%s3 + $0x8] sm:$0xf]
  %v112 = vld [vmem:[%s3 + $0xc] sm:$0xf]
  %v113 = vld [vmem:[%s4] sm:$0x1]
  %v115 = vlaneseq
  %v116 = vshrl.u32 %v115, 7
  %v117 = vsub.s32 0, %v116
  %v118 = vrot.slane %v113, %v117
  %v124 = vunpack.c.l.b16 %v109
  %v125 = vunpack.c.l.b16 %v110
  %v126 = vunpack.c.l.b16 %v111
  %v127 = vunpack.c.l.b16 %v112
  %v128 = vpack.c.b16 %v125, %v124
  %v129 = vpack.c.b16 %v127, %v126
  %v133 = vsel %vm31, %v107, 0
  %v136 = vsel %vm31, %v108, 0
  %138 = vmatprep.subr.bf16.mxu0 0
  %139 = vmatpush1.bf16.msra.mxu0 %v128
  %140 = vmatprep.subr.bf16.mxu0 0
  %141 = vmatpush1.bf16.msra.mxu0 %v129
  %142 = vmatprep.subr.bf16.mxu0 0
  %143 = vmatpush1.bf16.msra.mxu0 0
  %144 = vmatprep.subr.bf16.mxu0 0
  %145 = vmatpush1.bf16.msra.mxu0 0
  %146 = vmatprep.subr.bf16.mxu0 0
  %147 = vmatpush1.bf16.msra.mxu0 0
  %148 = vmatprep.subr.bf16.mxu0 0
  %149 = vmatpush1.bf16.msra.mxu0 0
  %150 = vmatprep.subr.bf16.mxu0 0
  %151 = vmatpush1.bf16.msra.mxu0 0
  %152 = vmatprep.subr.bf16.mxu0 0
  %153 = vmatpush1.bf16.msra.mxu0 0
  %154 = vmatprep.subr.bf16.mxu0 0
  %155 = vmatpush1.bf16.msra.mxu0 0
  %156 = vmatprep.subr.bf16.mxu0 0
  %157 = vmatpush1.bf16.msra.mxu0 0
  %158 = vmatprep.subr.bf16.mxu0 0
  %159 = vmatpush1.bf16.msra.mxu0 0
  %160 = vmatprep.subr.bf16.mxu0 0
  %161 = vmatpush1.bf16.msra.mxu0 0
  %162 = vmatprep.subr.bf16.mxu0 0
  %163 = vmatpush1.bf16.msra.mxu0 0
  %164 = vmatprep.subr.bf16.mxu0 0
  %165 = vmatpush1.bf16.msra.mxu0 0
  %166 = vmatprep.subr.bf16.mxu0 0
  %167 = vmatpush1.bf16.msra.mxu0 0
  %168 = vmatprep.subr.bf16.mxu0 0
  %169 = vmatpush1.bf16.msra.mxu0 0
  %170 = vmatprep.mubr.bf16.mxu0 0
  %171 = vmatmul.mubr.bf16.gmra.mrb[0].mxu0 %v133
  %v172 = vpop.f32.mrb[0].mxu0
  %v173 = vadd.f32 %v118, %v172
  %v174 = vpop.f32.mrb[0].mxu0
  %v175 = vpop.f32.mrb[0].mxu0
  %v176 = vadd.f32 %v118, %v175
  %v177 = vpop.f32.mrb[0].mxu0
  %178 = vmatprep.mubr.bf16.mxu0 0
  %179 = vmatmul.mubr.bf16.gmra.mrb[0].mxu0 %v136
  %v180 = vpop.f32.mrb[0].mxu0
  %v181 = vadd.f32 %v118, %v180
  %v182 = vpop.f32.mrb[0].mxu0
  %v183 = vpop.f32.mrb[0].mxu0
  %v184 = vadd.f32 %v118, %v183
  %v185 = vpop.f32.mrb[0].mxu0
  %186 = vdwg.mxu0
  %v187 = vmul.f32 %v173, 1.702
  %v188 = vmul.f32 %v176, 1.702
  %v189 = vmul.f32 %v181, 1.702
  %v190 = vmul.f32 %v184, 1.702
  %v191 = vxor.u32 %v187, 2147483648
  %v192 = vxor.u32 %v188, 2147483648
  %v193 = vxor.u32 %v189, 2147483648
  %v194 = vxor.u32 %v190, 2147483648
  %v195 = vmul.f32 %v191, 1.442695
  %v196 = vpow.pop %v195
  %v197 = vmul.f32 %v192, 1.442695
  %v198 = vpow.pop %v197
  %v199 = vmul.f32 %v193, 1.442695
  %v200 = vpow.pop %v199
  %v201 = vmul.f32 %v194, 1.442695
  %v202 = vpow.pop %v201
  %v203 = vadd.f32 %v196, 1.0
  %v204 = vadd.f32 %v198, 1.0
  %v205 = vadd.f32 %v200, 1.0
  %v206 = vadd.f32 %v202, 1.0
  %v207 = vrcp.pop %v203
  %v208 = vmul.f32 1.0, %v207
  %v209 = vrcp.pop %v204
  %v210 = vmul.f32 1.0, %v209
  %v211 = vrcp.pop %v205
  %v212 = vmul.f32 1.0, %v211
  %v213 = vrcp.pop %v206
  %v214 = vmul.f32 1.0, %v213
  %v215 = vmul.f32 %v173, %v208
  %v216 = vmul.f32 %v176, %v210
  %v217 = vmul.f32 %v181, %v212
  %v218 = vmul.f32 %v184, %v214
  %v219 = vpack.c.bf16 %v216, %v215
  %v220 = vpack.c.bf16 %v218, %v217
  %v221 = vld [vmem:[%s5] sm:$0xf]
  %v222 = vld [vmem:[%s5 + $0x4] sm:$0xf]
  %v223 = vld [vmem:[%s5 + $0x8] sm:$0xf]
  %v224 = vld [vmem:[%s5 + $0xc] sm:$0xf]
  %v225 = vld [vmem:[%s5 + $0x10] sm:$0xf]
  %v226 = vld [vmem:[%s5 + $0x14] sm:$0xf]
  %v227 = vld [vmem:[%s5 + $0x18] sm:$0xf]
  %v228 = vld [vmem:[%s5 + $0x1c] sm:$0xf]
  %v229 = vld [vmem:[%s5 + $0x20] sm:$0xf]
  %v230 = vld [vmem:[%s5 + $0x24] sm:$0xf]
  %v231 = vld [vmem:[%s5 + $0x28] sm:$0xf]
  %v232 = vld [vmem:[%s5 + $0x2c] sm:$0xf]
  %v233 = vld [vmem:[%s5 + $0x30] sm:$0xf]
  %v234 = vld [vmem:[%s5 + $0x34] sm:$0xf]
  %v235 = vld [vmem:[%s5 + $0x38] sm:$0xf]
  %v236 = vld [vmem:[%s5 + $0x3c] sm:$0xf]
  %v237 = vld [vmem:[%s6] sm:$0x1]
  %v239 = vlaneseq
  %v240 = vshrl.u32 %v239, 7
  %v241 = vsub.s32 0, %v240
  %v242 = vrot.slane %v237, %v241
  %v260 = vunpack.c.l.b16 %v221
  %v261 = vunpack.c.l.b16 %v222
  %v262 = vunpack.c.l.b16 %v223
  %v263 = vunpack.c.l.b16 %v224
  %v264 = vunpack.c.l.b16 %v225
  %v265 = vunpack.c.l.b16 %v226
  %v266 = vunpack.c.l.b16 %v227
  %v267 = vunpack.c.l.b16 %v228
  %v268 = vunpack.c.l.b16 %v229
  %v269 = vunpack.c.l.b16 %v230
  %v270 = vunpack.c.l.b16 %v231
  %v271 = vunpack.c.l.b16 %v232
  %v272 = vunpack.c.l.b16 %v233
  %v273 = vunpack.c.l.b16 %v234
  %v274 = vunpack.c.l.b16 %v235
  %v275 = vunpack.c.l.b16 %v236
  %v276 = vpack.c.b16 %v261, %v260
  %v277 = vpack.c.b16 %v263, %v262
  %v278 = vpack.c.b16 %v265, %v264
  %v279 = vpack.c.b16 %v267, %v266
  %v280 = vpack.c.b16 %v269, %v268
  %v281 = vpack.c.b16 %v271, %v270
  %v282 = vpack.c.b16 %v273, %v272
  %v283 = vpack.c.b16 %v275, %v274
  %292 = vmatprep.subr.bf16.mxu0 0
  %293 = vmatpush1.bf16.msra.mxu0 %v276
  %294 = vmatprep.subr.bf16.mxu0 0
  %295 = vmatpush1.bf16.msra.mxu0 %v277
  %296 = vmatprep.subr.bf16.mxu0 0
  %297 = vmatpush1.bf16.msra.mxu0 %v278
  %298 = vmatprep.subr.bf16.mxu0 0
  %299 = vmatpush1.bf16.msra.mxu0 %v279
  %300 = vmatprep.subr.bf16.mxu0 0
  %301 = vmatpush1.bf16.msra.mxu0 %v280
  %302 = vmatprep.subr.bf16.mxu0 0
  %303 = vmatpush1.bf16.msra.mxu0 %v281
  %304 = vmatprep.subr.bf16.mxu0 0
  %305 = vmatpush1.bf16.msra.mxu0 %v282
  %306 = vmatprep.subr.bf16.mxu0 0
  %307 = vmatpush1.bf16.msra.mxu0 %v283
  %308 = vmatprep.subr.bf16.mxu0 0
  %309 = vmatpush1.bf16.msra.mxu0 0
  %310 = vmatprep.subr.bf16.mxu0 0
  %311 = vmatpush1.bf16.msra.mxu0 0
  %312 = vmatprep.subr.bf16.mxu0 0
  %313 = vmatpush1.bf16.msra.mxu0 0
  %314 = vmatprep.subr.bf16.mxu0 0
  %315 = vmatpush1.bf16.msra.mxu0 0
  %316 = vmatprep.subr.bf16.mxu0 0
  %317 = vmatpush1.bf16.msra.mxu0 0
  %318 = vmatprep.subr.bf16.mxu0 0
  %319 = vmatpush1.bf16.msra.mxu0 0
  %320 = vmatprep.subr.bf16.mxu0 0
  %321 = vmatpush1.bf16.msra.mxu0 0
  %322 = vmatprep.subr.bf16.mxu0 0
  %323 = vmatpush1.bf16.msra.mxu0 0
  %324 = vmatprep.mubr.bf16.mxu0 0
  %325 = vmatmul.mubr.bf16.gmra.mrb[0].mxu0 %v219
  %v326 = vpop.f32.mrb[0].mxu0
  %v327 = vadd.f32 %v242, %v326
  %v328 = vpop.f32.mrb[0].mxu0
  %v329 = vpop.f32.mrb[0].mxu0
  %v330 = vadd.f32 %v242, %v329
  %v331 = vpop.f32.mrb[0].mxu0
  %332 = vmatprep.mubr.bf16.mxu0 0
  %333 = vmatmul.mubr.bf16.gmra.mrb[0].mxu0 %v220
  %v334 = vpop.f32.mrb[0].mxu0
  %v335 = vadd.f32 %v242, %v334
  %v336 = vpop.f32.mrb[0].mxu0
  %v337 = vpop.f32.mrb[0].mxu0
  %v338 = vadd.f32 %v242, %v337
  %v339 = vpop.f32.mrb[0].mxu0
  %340 = vdwg.mxu0
  %v341 = vadd.f32 %v27, %v327
  %v342 = vadd.f32 %v28, %v330
  %v343 = vadd.f32 %v29, %v335
  %v344 = vadd.f32 %v30, %v338
  %345 = vst.msk [vmem:[%s7] sm:$0xff] %vm31, %v341
  %346 = vst.msk [vmem:[%s7 + $0x8] sm:$0xff] %vm31, %v342
  %347 = vst.msk [vmem:[%s7 + $0x10] sm:$0xff] %vm31, %v343
  %348 = vst.msk [vmem:[%s7 + $0x18] sm:$0xff] %vm31, %v344
  // Predicated region
  $region30: #{encode_image.10} parent=0 // pred_check
    _
  $region31: #{encode_image.10} parent=0 // pred_check_branch
    %350 = sbr.rel (0) target = $region33
  $region32: #{encode_image.10} parent=0 // pred_region
    _
  $region33: #{encode_image.10} parent=0 // pred_fallthru
    _
  // Predicated region
  $region34: #{encode_image.10} parent=0 // pred_check
    _
  $region35: #{encode_image.10} parent=0 // pred_check_branch
    %352 = sbr.rel (0) target = $region37
  $region36: #{encode_image.10} parent=0 // pred_region
    _
  $region37: #{encode_image.10} parent=0 // pred_fallthru
    _

// kernel: encode_image.13
$region0: #{encode_image.13}
  #allocation0 [shape = 'u32[]', space=smem, size = 0x4, offset = 0x4, fixed_abs, tag = 'smem constant byte address 0x4 - core index']
  #allocation1 [shape = 'u32[144,128]{1,0:T(1,128)}', space=vmem, size = 0x12000, scoped, tag = 'internal scratch']
  %s0 = inlined_call_operand.vmem [shape: f32[4,32], index: 0, kind: input, shape index: {}]
  %s1 = inlined_call_operand.vmem [shape: f32[1,32], index: 1, kind: input, shape index: {}]
  %s2 = inlined_call_operand.vmem [shape: f32[1,32], index: 2, kind: input, shape index: {}]
  %s3 = inlined_call_operand.hbm [shape: f32[4,32], index: 3, kind: output, shape index: {}]
  %s4 = sld [smem:[#allocation0]]
  $region22: #{encode_image.13} parent=0
    _
  %s6 = ssub.s32 1, %s4
  %s7 = scalar_select 0, %s6, %s4
  $region1: #{encode_image.13} parent=0
    #allocation2 [shape = 'u8[2048]{0}', space=vmem, size = 0x800, scoped, tag = 'output window, operand 0, single buffered']
    #allocation3 [shape = 's32[1]{0}', space=sflag, size = 0x4, scoped, tag = 'scoped memory for encode_image.13']
    %8 = vsyncpa [#allocation3], 0
    // Predicated region
    $region2: #{encode_image.13} parent=1 // pred_check
      _
    $region3: #{encode_image.13} parent=1 // pred_check_branch
      %10 = sbr.rel (0) target = $region5
    $region4: #{encode_image.13} parent=1 // pred_region
      _
    $region5: #{encode_image.13} parent=1 // pred_fallthru
      _
    // Predicated region
    $region6: #{encode_image.13} parent=1 // pred_check
      _
    $region7: #{encode_image.13} parent=1 // pred_check_branch
      %12 = sbr.rel (0) target = $region9
    $region8: #{encode_image.13} parent=1 // pred_region
      _
    $region9: #{encode_image.13} parent=1 // pred_fallthru
      _
    // Predicated region
    $region10: #{encode_image.13} parent=1 // pred_check
      _
    $region11: #{encode_image.13} parent=1 // pred_check_branch
      %14 = sbr.rel (0) target = $region13
    $region12: #{encode_image.13} parent=1 // pred_region
      _
    $region13: #{encode_image.13} parent=1 // pred_fallthru
      _
    %v15 = vld [vmem:[%s0] sm:$0xf]
    %vm16 = vcmask 257024
    %v17 = vsel %vm16, %v15, 0.0
    %18 = vadd.xlane.f32.xlu0 %v17
    %v19 = vpop.xlane.xlu0 %18
    %v20 = vrcp.pop 32.0
    %v21 = vmul.f32 %v19, %v20
    %v22 = vsub.f32 %v15, %v21
    %v23 = vmul.f32 %v22, %v22
    %v24 = vsel %vm16, %v23, 0.0
    %25 = vadd.xlane.f32.xlu0 %v24
    %v26 = vpop.xlane.xlu0 %25
    %v27 = vmul.f32 %v26, %v20
    %v28 = vadd.f32 %v27, 1e-05
    %v29 = vrsqrt.pop %v28
    %v30 = vmul.f32 %v22, %v29
    %v31 = vld [vmem:[%s1] sm:$0x1]
    %v33 = vlaneseq
    %v34 = vshrl.u32 %v33, 7
    %v35 = vsub.s32 0, %v34
    %v36 = vrot.slane %v31, %v35
    %v38 = vmul.f32 %v30, %v36
    %v39 = vld [vmem:[%s2] sm:$0x1]
    %v41 = vlaneseq
    %v42 = vshrl.u32 %v41, 7
    %v43 = vsub.s32 0, %v42
    %v44 = vrot.slane %v39, %v43
    %v46 = vadd.f32 %v38, %v44
    %47 = vst.msk [vmem:[#allocation2] sm:$0xf] %vm16, %v46
    // Predicated region
    $region14: #{encode_image.13} parent=1 // pred_check
      _
    $region15: #{encode_image.13} parent=1 // pred_check_branch
      %49 = sbr.rel (0) target = $region17
    $region16: #{encode_image.13} parent=1 // pred_region
      %s51 = ssub.s32 64, 64
      %52 = vsyncadd [#allocation3], %s51
      %s54 = sshll.u32 [#allocation2], 4
      %s55 = int_to_ptr.vmem [resolvable:$true] %s54
      %57 = dma.vmem_to_hbm [thread:$0]  %s55, 64, %s3, [#allocation3]
    $region17: #{encode_image.13} parent=1 // pred_fallthru
      _
    // Predicated region
    $region18: #{encode_image.13} parent=1 // pred_check
      _
    $region19: #{encode_image.13} parent=1 // pred_check_branch
      %59 = sbr.rel (0) target = $region21
    $region20: #{encode_image.13} parent=1 // pred_region
      %60 = dma.done [#allocation3], 64
    $region21: #{encode_image.13} parent=1 // pred_fallthru
      _
    %61 = vsyncpa [#allocation3], 1

</llo_original>
